<compile_context>
chip_gen: v6e
topology: v6e:2x2x1
jax: 0.10.0
libtpu: 0.0.40
codegen_flags: <defaults>
</compile_context>

<pallas_src>
import jax
import jax.numpy as jnp
from jax.experimental import pallas as pl
from jax.experimental.pallas import tpu as pltpu

IN_F = 784
HID = 200
OUT_F = 10

HID_P = 256       # 200 padded to 2*128 lanes
OUT_P = 128       # 10 padded to 128 lanes (lane-dense output stores)
MIN_TILE_B = 256  # MXU-friendly minimum batch tile
MAX_TILE_B = 1024 # VMEM check @1024: x 2*3.2MB + out 2*0.25MB + weights 2*0.6MB + h1/h2 ~3MB << 32MiB


def _pick_tile_b(B):
    """Batch tile: as large as MAX_TILE_B, but keep >=2 grid steps for big batches (v7x 2 TCs)."""
    if B <= 2 * MIN_TILE_B:
        return MIN_TILE_B
    half = (B // 2) // MIN_TILE_B * MIN_TILE_B
    return min(MAX_TILE_B, half)


def mlp_kernel(x_ref, w1_ref, b1_ref, w2_ref, b2_ref, w3_ref, b3_ref, o_ref):
    # x arrives f32 straight from HBM; cast to bf16 in-kernel (no extra wrapper HBM pass).
    x = x_ref[...].astype(jnp.bfloat16)
    # Layer 1: Linear(784 -> 256pad) + ReLU   (bf16 MXU inputs, f32 accumulate)
    h1 = jnp.dot(x, w1_ref[...], preferred_element_type=jnp.float32)
    h1 = jnp.maximum(h1 + b1_ref[...], 0.0)
    # Layer 2: Linear(256pad -> 256pad) + ReLU
    h2 = jnp.dot(h1.astype(jnp.bfloat16), w2_ref[...], preferred_element_type=jnp.float32)
    h2 = jnp.maximum(h2 + b2_ref[...], 0.0)
    # Layer 3: Linear(256pad -> 128pad); bias-add in f32, store bf16 (lane-dense, unmasked)
    out = jnp.dot(h2.astype(jnp.bfloat16), w3_ref[...], preferred_element_type=jnp.float32)
    o_ref[...] = (out + b3_ref[...]).astype(o_ref.dtype)


@jax.jit
def mlp_forward(x, w1, b1, w2, b2, w3, b3):
    """x: [B, 784] f32. Weights zero-padded to lane-aligned widths, stored [in, out].
    Returns [B, 10] f32 logits."""
    B = x.shape[0]
    tile_b = _pick_tile_b(B)
    n_tiles = pl.cdiv(B, tile_b)
    Bp = n_tiles * tile_b
    if Bp != B:
        x = jnp.pad(x, ((0, Bp - B), (0, 0)))

    # One-time bf16 cast of the small, VMEM-resident weights (biases stay f32).
    w1b, w2b, w3b = (w.astype(jnp.bfloat16) for w in (w1, w2, w3))

    const = lambda i: (0, 0)  # same block every grid step -> weights stay resident in VMEM
    out_padded = pl.pallas_call(
        mlp_kernel,
        out_shape=jax.ShapeDtypeStruct((Bp, OUT_P), jnp.bfloat16),
        grid=(n_tiles,),
        in_specs=[
            pl.BlockSpec((tile_b, IN_F), lambda i: (i, 0)),   # streamed f32 batch tile
            pl.BlockSpec((IN_F, HID_P), const),
            pl.BlockSpec((1, HID_P), const),
            pl.BlockSpec((HID_P, HID_P), const),
            pl.BlockSpec((1, HID_P), const),
            pl.BlockSpec((HID_P, OUT_P), const),
            pl.BlockSpec((1, OUT_P), const),
        ],
        out_specs=pl.BlockSpec((tile_b, OUT_P), lambda i: (i, 0)),
        compiler_params=pltpu.CompilerParams(
            dimension_semantics=("parallel",)),  # batch-parallel -> both TCs on v7x
    )(x, w1b, b1, w2b, b2, w3b, b3)
    return out_padded[:B, :OUT_F].astype(jnp.float32)


def init_params(key):
    """nn.Linear-style init; weights stored [in, out] and zero-padded to lane-aligned widths."""
    dims = [(IN_F, HID), (HID, HID), (HID, OUT_F)]
    pads = [(IN_F, HID_P), (HID_P, HID_P), (HID_P, OUT_P)]
    params = []
    for (fan_in, fan_out), (pin, pout) in zip(dims, pads):
        key, kw, kb = jax.random.split(key, 3)
        bound = 1.0 / jnp.sqrt(fan_in)
        w = jax.random.uniform(kw, (fan_in, fan_out), jnp.float32, -bound, bound)
        b = jax.random.uniform(kb, (1, fan_out), jnp.float32, -bound, bound)
        w = jnp.pad(w, ((0, pin - fan_in), (0, pout - fan_out)))  # zero-padding: exact
        b = jnp.pad(b, ((0, 0), (0, pout - fan_out)))
        params.extend([w, b])
    return params


if __name__ == "__main__":
    key = jax.random.PRNGKey(0)
    kx, kp = jax.random.split(key)

    B = 8  # small example batch; wrapper pads it up to one 256-row tile
    x = jax.random.normal(kx, (B, IN_F), jnp.float32)
    w1, b1, w2, b2, w3, b3 = init_params(kp)

    out = mlp_forward(x, w1, b1, w2, b2, w3, b3)
    out = jax.block_until_ready(out)

    # f32 reference on the (exactly zero-padded) params; kernel feeds the MXU in bf16 and
    # stores bf16 logits, so compare at bf16-level tolerance.
    h = jnp.maximum(x @ w1 + b1, 0.0)
    h = jnp.maximum(h @ w2 + b2, 0.0)
    ref = (h @ w3 + b3)[:, :OUT_F]

    assert out.shape == (B, OUT_F)
    assert out.dtype == jnp.float32
    assert jnp.allclose(out, ref, atol=3e-2, rtol=3e-2), float(jnp.max(jnp.abs(out - ref)))

    print("KERNEL_OK")
</pallas_src>

<mosaic_0001>
module attributes {stable_mosaic.version = 11 : i64} {
  func.func @mlp_kernel(%arg0: i32, %arg1: memref<256x784xf32, #tpu.memory_space<vmem>>, %arg2: memref<784x256xbf16, #tpu.memory_space<vmem>>, %arg3: memref<1x256xf32, #tpu.memory_space<vmem>>, %arg4: memref<256x256xbf16, #tpu.memory_space<vmem>>, %arg5: memref<1x256xf32, #tpu.memory_space<vmem>>, %arg6: memref<256x128xbf16, #tpu.memory_space<vmem>>, %arg7: memref<1x128xf32, #tpu.memory_space<vmem>>, %arg8: memref<256x128xbf16, #tpu.memory_space<vmem>>) attributes {dimension_semantics = [#tpu.dimension_semantics<parallel>], iteration_bounds = array<i64: 1>, scalar_prefetch = 0 : i64, scratch_operands = 0 : i64, tpu.core_type = #tpu.core_type<tc>, window_params = [{transform_indices = @transform_0, window_bounds = array<i64: 256, 784>}, {pipeline_mode = #tpu.pipeline_mode<synchronous>, transform_indices = @transform_1, window_bounds = array<i64: 784, 256>}, {pipeline_mode = #tpu.pipeline_mode<synchronous>, transform_indices = @transform_2, window_bounds = array<i64: 1, 256>}, {pipeline_mode = #tpu.pipeline_mode<synchronous>, transform_indices = @transform_3, window_bounds = array<i64: 256, 256>}, {pipeline_mode = #tpu.pipeline_mode<synchronous>, transform_indices = @transform_4, window_bounds = array<i64: 1, 256>}, {pipeline_mode = #tpu.pipeline_mode<synchronous>, transform_indices = @transform_5, window_bounds = array<i64: 256, 128>}, {pipeline_mode = #tpu.pipeline_mode<synchronous>, transform_indices = @transform_6, window_bounds = array<i64: 1, 128>}, {transform_indices = @transform_7, window_bounds = array<i64: 256, 128>}]} {
    %c0 = arith.constant 0 : index
    %c0_0 = arith.constant 0 : index
    %0 = vector.load %arg1[%c0, %c0_0] : memref<256x784xf32, #tpu.memory_space<vmem>>, vector<256x784xf32>
    %1 = arith.truncf %0 : vector<256x784xf32> to vector<256x784xbf16>
    %c0_1 = arith.constant 0 : index
    %c0_2 = arith.constant 0 : index
    %2 = vector.load %arg2[%c0_1, %c0_2] : memref<784x256xbf16, #tpu.memory_space<vmem>>, vector<784x256xbf16>
    %cst = arith.constant dense<0.000000e+00> : vector<256x256xf32>
    %3 = tpu.matmul %1, %2, %cst {dimension_numbers = #tpu.dot_dimension_numbers<[1], [0], [0], [1], [0, 0, 1, 1], [], []>} : vector<256x784xbf16>, vector<784x256xbf16>, vector<256x256xf32> -> vector<256x256xf32>
    %c0_3 = arith.constant 0 : index
    %c0_4 = arith.constant 0 : index
    %4 = vector.load %arg3[%c0_3, %c0_4] : memref<1x256xf32, #tpu.memory_space<vmem>>, vector<1x256xf32>
    %5 = vector.broadcast %4 : vector<1x256xf32> to vector<256x256xf32>
    %6 = arith.addf %3, %5 : vector<256x256xf32>
    %cst_5 = arith.constant 0.000000e+00 : f32
    %7 = vector.broadcast %cst_5 : f32 to vector<256x256xf32>
    %8 = arith.maximumf %6, %7 : vector<256x256xf32>
    %9 = arith.truncf %8 : vector<256x256xf32> to vector<256x256xbf16>
    %c0_6 = arith.constant 0 : index
    %c0_7 = arith.constant 0 : index
    %10 = vector.load %arg4[%c0_6, %c0_7] : memref<256x256xbf16, #tpu.memory_space<vmem>>, vector<256x256xbf16>
    %cst_8 = arith.constant dense<0.000000e+00> : vector<256x256xf32>
    %11 = tpu.matmul %9, %10, %cst_8 {dimension_numbers = #tpu.dot_dimension_numbers<[1], [0], [0], [1], [0, 0, 1, 1], [], []>} : vector<256x256xbf16>, vector<256x256xbf16>, vector<256x256xf32> -> vector<256x256xf32>
    %c0_9 = arith.constant 0 : index
    %c0_10 = arith.constant 0 : index
    %12 = vector.load %arg5[%c0_9, %c0_10] : memref<1x256xf32, #tpu.memory_space<vmem>>, vector<1x256xf32>
    %13 = vector.broadcast %12 : vector<1x256xf32> to vector<256x256xf32>
    %14 = arith.addf %11, %13 : vector<256x256xf32>
    %cst_11 = arith.constant 0.000000e+00 : f32
    %15 = vector.broadcast %cst_11 : f32 to vector<256x256xf32>
    %16 = arith.maximumf %14, %15 : vector<256x256xf32>
    %17 = arith.truncf %16 : vector<256x256xf32> to vector<256x256xbf16>
    %c0_12 = arith.constant 0 : index
    %c0_13 = arith.constant 0 : index
    %18 = vector.load %arg6[%c0_12, %c0_13] : memref<256x128xbf16, #tpu.memory_space<vmem>>, vector<256x128xbf16>
    %cst_14 = arith.constant dense<0.000000e+00> : vector<256x128xf32>
    %19 = tpu.matmul %17, %18, %cst_14 {dimension_numbers = #tpu.dot_dimension_numbers<[1], [0], [0], [1], [0, 0, 1, 1], [], []>} : vector<256x256xbf16>, vector<256x128xbf16>, vector<256x128xf32> -> vector<256x128xf32>
    %c0_15 = arith.constant 0 : index
    %c0_16 = arith.constant 0 : index
    %20 = vector.load %arg7[%c0_15, %c0_16] : memref<1x128xf32, #tpu.memory_space<vmem>>, vector<1x128xf32>
    %21 = vector.broadcast %20 : vector<1x128xf32> to vector<256x128xf32>
    %22 = arith.addf %19, %21 : vector<256x128xf32>
    %23 = arith.truncf %22 : vector<256x128xf32> to vector<256x128xbf16>
    %c0_17 = arith.constant 0 : index
    %c0_18 = arith.constant 0 : index
    %24 = vector.load %arg8[%c0_17, %c0_18] : memref<256x128xbf16, #tpu.memory_space<vmem>>, vector<256x128xbf16>
    tpu.vector_store %arg8[%c0_17, %c0_18], %23 {strides = array<i32>} : memref<256x128xbf16, #tpu.memory_space<vmem>>, vector<256x128xbf16>,
    return
  }
  func.func @transform_0(%arg0: i32) -> (i32, i32) {
    %c0_i32 = arith.constant 0 : i32
    %c0_i32_0 = arith.constant 0 : i32
    return %arg0, %c0_i32 : i32, i32
  }
  func.func @transform_1(%arg0: i32) -> (i32, i32) {
    %c0_i32 = arith.constant 0 : i32
    %c0_i32_0 = arith.constant 0 : i32
    %c0_i32_1 = arith.constant 0 : i32
    return %c0_i32, %c0_i32_0 : i32, i32
  }
  func.func @transform_2(%arg0: i32) -> (i32, i32) {
    %c0_i32 = arith.constant 0 : i32
    %c0_i32_0 = arith.constant 0 : i32
    %c0_i32_1 = arith.constant 0 : i32
    return %c0_i32, %c0_i32_0 : i32, i32
  }
  func.func @transform_3(%arg0: i32) -> (i32, i32) {
    %c0_i32 = arith.constant 0 : i32
    %c0_i32_0 = arith.constant 0 : i32
    %c0_i32_1 = arith.constant 0 : i32
    return %c0_i32, %c0_i32_0 : i32, i32
  }
  func.func @transform_4(%arg0: i32) -> (i32, i32) {
    %c0_i32 = arith.constant 0 : i32
    %c0_i32_0 = arith.constant 0 : i32
    %c0_i32_1 = arith.constant 0 : i32
    return %c0_i32, %c0_i32_0 : i32, i32
  }
  func.func @transform_5(%arg0: i32) -> (i32, i32) {
    %c0_i32 = arith.constant 0 : i32
    %c0_i32_0 = arith.constant 0 : i32
    %c0_i32_1 = arith.constant 0 : i32
    return %c0_i32, %c0_i32_0 : i32, i32
  }
  func.func @transform_6(%arg0: i32) -> (i32, i32) {
    %c0_i32 = arith.constant 0 : i32
    %c0_i32_0 = arith.constant 0 : i32
    %c0_i32_1 = arith.constant 0 : i32
    return %c0_i32, %c0_i32_0 : i32, i32
  }
  func.func @transform_7(%arg0: i32) -> (i32, i32) {
    %c0_i32 = arith.constant 0 : i32
    %c0_i32_0 = arith.constant 0 : i32
    return %arg0, %c0_i32 : i32, i32
  }
}

</mosaic_0001>

<llo_original>
// kernel: mlp_forward.1
$region0: #{mlp_forward.1}
  #allocation0 [shape = 'u32[]', space=smem, size = 0x4, offset = 0x4, fixed_abs, tag = 'smem constant byte address 0x4 - core index']
  #allocation1 [shape = 'u32[144,128]{1,0:T(1,128)}', space=vmem, size = 0x12000, scoped, tag = 'internal scratch']
  %s0 = inlined_call_operand.vmem [shape: f32[256,784], index: 0, kind: input, shape index: {}]
  %s1 = inlined_call_operand.vmem [shape: bf16[784,256], index: 1, kind: input, shape index: {}]
  %s2 = inlined_call_operand.vmem [shape: f32[1,256], index: 2, kind: input, shape index: {}]
  %s3 = inlined_call_operand.vmem [shape: bf16[256,256], index: 3, kind: input, shape index: {}]
  %s4 = inlined_call_operand.vmem [shape: f32[1,256], index: 4, kind: input, shape index: {}]
  %s5 = inlined_call_operand.vmem [shape: bf16[256,128], index: 5, kind: input, shape index: {}]
  %s6 = inlined_call_operand.vmem [shape: f32[1,128], index: 6, kind: input, shape index: {}]
  %s7 = inlined_call_operand.vmem [shape: bf16[256,128], index: 7, kind: output, shape index: {}]
  %s8 = sld [smem:[#allocation0]]
  $region38: #{mlp_forward.1} parent=0
    _
  %s10 = ssub.s32 1, %s8
  %s11 = scalar_select 0, %s10, %s8
  // Predicated region
  $region2: #{mlp_forward.1} parent=0 // pred_check
    _
  $region3: #{mlp_forward.1} parent=0 // pred_check_branch
    %13 = sbr.rel (0) target = $region5
  $region4: #{mlp_forward.1} parent=0 // pred_region
    _
  $region5: #{mlp_forward.1} parent=0 // pred_fallthru
    _
  // Predicated region
  $region6: #{mlp_forward.1} parent=0 // pred_check
    _
  $region7: #{mlp_forward.1} parent=0 // pred_check_branch
    %15 = sbr.rel (0) target = $region9
  $region8: #{mlp_forward.1} parent=0 // pred_region
    _
  $region9: #{mlp_forward.1} parent=0 // pred_fallthru
    _
  // Predicated region
  $region10: #{mlp_forward.1} parent=0 // pred_check
    _
  $region11: #{mlp_forward.1} parent=0 // pred_check_branch
    %17 = sbr.rel (0) target = $region13
  $region12: #{mlp_forward.1} parent=0 // pred_region
    _
  $region13: #{mlp_forward.1} parent=0 // pred_fallthru
    _
  // Predicated region
  $region14: #{mlp_forward.1} parent=0 // pred_check
    _
  $region15: #{mlp_forward.1} parent=0 // pred_check_branch
    %19 = sbr.rel (0) target = $region17
  $region16: #{mlp_forward.1} parent=0 // pred_region
    _
  $region17: #{mlp_forward.1} parent=0 // pred_fallthru
    _
  // Predicated region
  $region18: #{mlp_forward.1} parent=0 // pred_check
    _
  $region19: #{mlp_forward.1} parent=0 // pred_check_branch
    %21 = sbr.rel (0) target = $region21
  $region20: #{mlp_forward.1} parent=0 // pred_region
    _
  $region21: #{mlp_forward.1} parent=0 // pred_fallthru
    _
  // Predicated region
  $region22: #{mlp_forward.1} parent=0 // pred_check
    _
  $region23: #{mlp_forward.1} parent=0 // pred_check_branch
    %23 = sbr.rel (0) target = $region25
  $region24: #{mlp_forward.1} parent=0 // pred_region
    _
  $region25: #{mlp_forward.1} parent=0 // pred_fallthru
    _
  // Predicated region
  $region26: #{mlp_forward.1} parent=0 // pred_check
    _
  $region27: #{mlp_forward.1} parent=0 // pred_check_branch
    %25 = sbr.rel (0) target = $region29
  $region28: #{mlp_forward.1} parent=0 // pred_region
    _
  $region29: #{mlp_forward.1} parent=0 // pred_fallthru
    _
  %v27 = vld [vmem:[%s0] sm:$0xff]
  %v28 = vld [vmem:[%s0 + $0x8] sm:$0xff]
  %v29 = vld [vmem:[%s0 + $0x10] sm:$0xff]
  %v30 = vld [vmem:[%s0 + $0x18] sm:$0xff]
  %v31 = vld [vmem:[%s0 + $0x20] sm:$0xff]
  %v32 = vld [vmem:[%s0 + $0x28] sm:$0xff]
  %v33 = vld [vmem:[%s0 + $0x30] sm:$0xff]
  %v34 = vld [vmem:[%s0 + $0x38] sm:$0xff]
  %v35 = vld [vmem:[%s0 + $0x40] sm:$0xff]
  %v36 = vld [vmem:[%s0 + $0x48] sm:$0xff]
  %v37 = vld [vmem:[%s0 + $0x50] sm:$0xff]
  %v38 = vld [vmem:[%s0 + $0x58] sm:$0xff]
  %v39 = vld [vmem:[%s0 + $0x60] sm:$0xff]
  %v40 = vld [vmem:[%s0 + $0x68] sm:$0xff]
  %v41 = vld [vmem:[%s0 + $0x70] sm:$0xff]
  %v42 = vld [vmem:[%s0 + $0x78] sm:$0xff]
  %v43 = vld [vmem:[%s0 + $0x80] sm:$0xff]
  %v44 = vld [vmem:[%s0 + $0x88] sm:$0xff]
  %v45 = vld [vmem:[%s0 + $0x90] sm:$0xff]
  %v46 = vld [vmem:[%s0 + $0x98] sm:$0xff]
  %v47 = vld [vmem:[%s0 + $0xa0] sm:$0xff]
  %v48 = vld [vmem:[%s0 + $0xa8] sm:$0xff]
  %v49 = vld [vmem:[%s0 + $0xb0] sm:$0xff]
  %v50 = vld [vmem:[%s0 + $0xb8] sm:$0xff]
  %v51 = vld [vmem:[%s0 + $0xc0] sm:$0xff]
  %v52 = vld [vmem:[%s0 + $0xc8] sm:$0xff]
  %v53 = vld [vmem:[%s0 + $0xd0] sm:$0xff]
  %v54 = vld [vmem:[%s0 + $0xd8] sm:$0xff]
  %v55 = vld [vmem:[%s0 + $0xe0] sm:$0xff]
  %v56 = vld [vmem:[%s0 + $0xe8] sm:$0xff]
  %v57 = vld [vmem:[%s0 + $0xf0] sm:$0xff]
  %v58 = vld [vmem:[%s0 + $0xf8] sm:$0xff]
  %v59 = vld [vmem:[%s0 + $0x100] sm:$0xff]
  %v60 = vld [vmem:[%s0 + $0x108] sm:$0xff]
  %v61 = vld [vmem:[%s0 + $0x110] sm:$0xff]
  %v62 = vld [vmem:[%s0 + $0x118] sm:$0xff]
  %v63 = vld [vmem:[%s0 + $0x120] sm:$0xff]
  %v64 = vld [vmem:[%s0 + $0x128] sm:$0xff]
  %v65 = vld [vmem:[%s0 + $0x130] sm:$0xff]
  %v66 = vld [vmem:[%s0 + $0x138] sm:$0xff]
  %v67 = vld [vmem:[%s0 + $0x140] sm:$0xff]
  %v68 = vld [vmem:[%s0 + $0x148] sm:$0xff]
  %v69 = vld [vmem:[%s0 + $0x150] sm:$0xff]
  %v70 = vld [vmem:[%s0 + $0x158] sm:$0xff]
  %v71 = vld [vmem:[%s0 + $0x160] sm:$0xff]
  %v72 = vld [vmem:[%s0 + $0x168] sm:$0xff]
  %v73 = vld [vmem:[%s0 + $0x170] sm:$0xff]
  %v74 = vld [vmem:[%s0 + $0x178] sm:$0xff]
  %v75 = vld [vmem:[%s0 + $0x180] sm:$0xff]
  %v76 = vld [vmem:[%s0 + $0x188] sm:$0xff]
  %v77 = vld [vmem:[%s0 + $0x190] sm:$0xff]
  %v78 = vld [vmem:[%s0 + $0x198] sm:$0xff]
  %v79 = vld [vmem:[%s0 + $0x1a0] sm:$0xff]
  %v80 = vld [vmem:[%s0 + $0x1a8] sm:$0xff]
  %v81 = vld [vmem:[%s0 + $0x1b0] sm:$0xff]
  %v82 = vld [vmem:[%s0 + $0x1b8] sm:$0xff]
  %v83 = vld [vmem:[%s0 + $0x1c0] sm:$0xff]
  %v84 = vld [vmem:[%s0 + $0x1c8] sm:$0xff]
  %v85 = vld [vmem:[%s0 + $0x1d0] sm:$0xff]
  %v86 = vld [vmem:[%s0 + $0x1d8] sm:$0xff]
  %v87 = vld [vmem:[%s0 + $0x1e0] sm:$0xff]
  %v88 = vld [vmem:[%s0 + $0x1e8] sm:$0xff]
  %v89 = vld [vmem:[%s0 + $0x1f0] sm:$0xff]
  %v90 = vld [vmem:[%s0 + $0x1f8] sm:$0xff]
  %v91 = vld [vmem:[%s0 + $0x200] sm:$0xff]
  %v92 = vld [vmem:[%s0 + $0x208] sm:$0xff]
  %v93 = vld [vmem:[%s0 + $0x210] sm:$0xff]
  %v94 = vld [vmem:[%s0 + $0x218] sm:$0xff]
  %v95 = vld [vmem:[%s0 + $0x220] sm:$0xff]
  %v96 = vld [vmem:[%s0 + $0x228] sm:$0xff]
  %v97 = vld [vmem:[%s0 + $0x230] sm:$0xff]
  %v98 = vld [vmem:[%s0 + $0x238] sm:$0xff]
  %v99 = vld [vmem:[%s0 + $0x240] sm:$0xff]
  %v100 = vld [vmem:[%s0 + $0x248] sm:$0xff]
  %v101 = vld [vmem:[%s0 + $0x250] sm:$0xff]
  %v102 = vld [vmem:[%s0 + $0x258] sm:$0xff]
  %v103 = vld [vmem:[%s0 + $0x260] sm:$0xff]
  %v104 = vld [vmem:[%s0 + $0x268] sm:$0xff]
  %v105 = vld [vmem:[%s0 + $0x270] sm:$0xff]
  %v106 = vld [vmem:[%s0 + $0x278] sm:$0xff]
  %v107 = vld [vmem:[%s0 + $0x280] sm:$0xff]
  %v108 = vld [vmem:[%s0 + $0x288] sm:$0xff]
  %v109 = vld [vmem:[%s0 + $0x290] sm:$0xff]
  %v110 = vld [vmem:[%s0 + $0x298] sm:$0xff]
  %v111 = vld [vmem:[%s0 + $0x2a0] sm:$0xff]
  %v112 = vld [vmem:[%s0 + $0x2a8] sm:$0xff]
  %v113 = vld [vmem:[%s0 + $0x2b0] sm:$0xff]
  %v114 = vld [vmem:[%s0 + $0x2b8] sm:$0xff]
  %v115 = vld [vmem:[%s0 + $0x2c0] sm:$0xff]
  %v116 = vld [vmem:[%s0 + $0x2c8] sm:$0xff]
  %v117 = vld [vmem:[%s0 + $0x2d0] sm:$0xff]
  %v118 = vld [vmem:[%s0 + $0x2d8] sm:$0xff]
  %v119 = vld [vmem:[%s0 + $0x2e0] sm:$0xff]
  %v120 = vld [vmem:[%s0 + $0x2e8] sm:$0xff]
  %v121 = vld [vmem:[%s0 + $0x2f0] sm:$0xff]
  %v122 = vld [vmem:[%s0 + $0x2f8] sm:$0xff]
  %v123 = vld [vmem:[%s0 + $0x300] sm:$0xff]
  %v124 = vld [vmem:[%s0 + $0x308] sm:$0xff]
  %v125 = vld [vmem:[%s0 + $0x310] sm:$0xff]
  %v126 = vld [vmem:[%s0 + $0x318] sm:$0xff]
  %v127 = vld [vmem:[%s0 + $0x320] sm:$0xff]
  %v128 = vld [vmem:[%s0 + $0x328] sm:$0xff]
  %v129 = vld [vmem:[%s0 + $0x330] sm:$0xff]
  %v130 = vld [vmem:[%s0 + $0x338] sm:$0xff]
  %v131 = vld [vmem:[%s0 + $0x340] sm:$0xff]
  %v132 = vld [vmem:[%s0 + $0x348] sm:$0xff]
  %v133 = vld [vmem:[%s0 + $0x350] sm:$0xff]
  %v134 = vld [vmem:[%s0 + $0x358] sm:$0xff]
  %v135 = vld [vmem:[%s0 + $0x360] sm:$0xff]
  %v136 = vld [vmem:[%s0 + $0x368] sm:$0xff]
  %v137 = vld [vmem:[%s0 + $0x370] sm:$0xff]
  %v138 = vld [vmem:[%s0 + $0x378] sm:$0xff]
  %v139 = vld [vmem:[%s0 + $0x380] sm:$0xff]
  %v140 = vld [vmem:[%s0 + $0x388] sm:$0xff]
  %v141 = vld [vmem:[%s0 + $0x390] sm:$0xff]
  %v142 = vld [vmem:[%s0 + $0x398] sm:$0xff]
  %v143 = vld [vmem:[%s0 + $0x3a0] sm:$0xff]
  %v144 = vld [vmem:[%s0 + $0x3a8] sm:$0xff]
  %v145 = vld [vmem:[%s0 + $0x3b0] sm:$0xff]
  %v146 = vld [vmem:[%s0 + $0x3b8] sm:$0xff]
  %v147 = vld [vmem:[%s0 + $0x3c0] sm:$0xff]
  %v148 = vld [vmem:[%s0 + $0x3c8] sm:$0xff]
  %v149 = vld [vmem:[%s0 + $0x3d0] sm:$0xff]
  %v150 = vld [vmem:[%s0 + $0x3d8] sm:$0xff]
  %v151 = vld [vmem:[%s0 + $0x3e0] sm:$0xff]
  %v152 = vld [vmem:[%s0 + $0x3e8] sm:$0xff]
  %v153 = vld [vmem:[%s0 + $0x3f0] sm:$0xff]
  %v154 = vld [vmem:[%s0 + $0x3f8] sm:$0xff]
  %v155 = vld [vmem:[%s0 + $0x400] sm:$0xff]
  %v156 = vld [vmem:[%s0 + $0x408] sm:$0xff]
  %v157 = vld [vmem:[%s0 + $0x410] sm:$0xff]
  %v158 = vld [vmem:[%s0 + $0x418] sm:$0xff]
  %v159 = vld [vmem:[%s0 + $0x420] sm:$0xff]
  %v160 = vld [vmem:[%s0 + $0x428] sm:$0xff]
  %v161 = vld [vmem:[%s0 + $0x430] sm:$0xff]
  %v162 = vld [vmem:[%s0 + $0x438] sm:$0xff]
  %v163 = vld [vmem:[%s0 + $0x440] sm:$0xff]
  %v164 = vld [vmem:[%s0 + $0x448] sm:$0xff]
  %v165 = vld [vmem:[%s0 + $0x450] sm:$0xff]
  %v166 = vld [vmem:[%s0 + $0x458] sm:$0xff]
  %v167 = vld [vmem:[%s0 + $0x460] sm:$0xff]
  %v168 = vld [vmem:[%s0 + $0x468] sm:$0xff]
  %v169 = vld [vmem:[%s0 + $0x470] sm:$0xff]
  %v170 = vld [vmem:[%s0 + $0x478] sm:$0xff]
  %v171 = vld [vmem:[%s0 + $0x480] sm:$0xff]
  %v172 = vld [vmem:[%s0 + $0x488] sm:$0xff]
  %v173 = vld [vmem:[%s0 + $0x490] sm:$0xff]
  %v174 = vld [vmem:[%s0 + $0x498] sm:$0xff]
  %v175 = vld [vmem:[%s0 + $0x4a0] sm:$0xff]
  %v176 = vld [vmem:[%s0 + $0x4a8] sm:$0xff]
  %v177 = vld [vmem:[%s0 + $0x4b0] sm:$0xff]
  %v178 = vld [vmem:[%s0 + $0x4b8] sm:$0xff]
  %v179 = vld [vmem:[%s0 + $0x4c0] sm:$0xff]
  %v180 = vld [vmem:[%s0 + $0x4c8] sm:$0xff]
  %v181 = vld [vmem:[%s0 + $0x4d0] sm:$0xff]
  %v182 = vld [vmem:[%s0 + $0x4d8] sm:$0xff]
  %v183 = vld [vmem:[%s0 + $0x4e0] sm:$0xff]
  %v184 = vld [vmem:[%s0 + $0x4e8] sm:$0xff]
  %v185 = vld [vmem:[%s0 + $0x4f0] sm:$0xff]
  %v186 = vld [vmem:[%s0 + $0x4f8] sm:$0xff]
  %v187 = vld [vmem:[%s0 + $0x500] sm:$0xff]
  %v188 = vld [vmem:[%s0 + $0x508] sm:$0xff]
  %v189 = vld [vmem:[%s0 + $0x510] sm:$0xff]
  %v190 = vld [vmem:[%s0 + $0x518] sm:$0xff]
  %v191 = vld [vmem:[%s0 + $0x520] sm:$0xff]
  %v192 = vld [vmem:[%s0 + $0x528] sm:$0xff]
  %v193 = vld [vmem:[%s0 + $0x530] sm:$0xff]
  %v194 = vld [vmem:[%s0 + $0x538] sm:$0xff]
  %v195 = vld [vmem:[%s0 + $0x540] sm:$0xff]
  %v196 = vld [vmem:[%s0 + $0x548] sm:$0xff]
  %v197 = vld [vmem:[%s0 + $0x550] sm:$0xff]
  %v198 = vld [vmem:[%s0 + $0x558] sm:$0xff]
  %v199 = vld [vmem:[%s0 + $0x560] sm:$0xff]
  %v200 = vld [vmem:[%s0 + $0x568] sm:$0xff]
  %v201 = vld [vmem:[%s0 + $0x570] sm:$0xff]
  %v202 = vld [vmem:[%s0 + $0x578] sm:$0xff]
  %v203 = vld [vmem:[%s0 + $0x580] sm:$0xff]
  %v204 = vld [vmem:[%s0 + $0x588] sm:$0xff]
  %v205 = vld [vmem:[%s0 + $0x590] sm:$0xff]
  %v206 = vld [vmem:[%s0 + $0x598] sm:$0xff]
  %v207 = vld [vmem:[%s0 + $0x5a0] sm:$0xff]
  %v208 = vld [vmem:[%s0 + $0x5a8] sm:$0xff]
  %v209 = vld [vmem:[%s0 + $0x5b0] sm:$0xff]
  %v210 = vld [vmem:[%s0 + $0x5b8] sm:$0xff]
  %v211 = vld [vmem:[%s0 + $0x5c0] sm:$0xff]
  %v212 = vld [vmem:[%s0 + $0x5c8] sm:$0xff]
  %v213 = vld [vmem:[%s0 + $0x5d0] sm:$0xff]
  %v214 = vld [vmem:[%s0 + $0x5d8] sm:$0xff]
  %v215 = vld [vmem:[%s0 + $0x5e0] sm:$0xff]
  %v216 = vld [vmem:[%s0 + $0x5e8] sm:$0xff]
  %v217 = vld [vmem:[%s0 + $0x5f0] sm:$0xff]
  %v218 = vld [vmem:[%s0 + $0x5f8] sm:$0xff]
  %v219 = vld [vmem:[%s0 + $0x600] sm:$0xff]
  %v220 = vld [vmem:[%s0 + $0x608] sm:$0xff]
  %v221 = vld [vmem:[%s0 + $0x610] sm:$0xff]
  %v222 = vld [vmem:[%s0 + $0x618] sm:$0xff]
  %v223 = vld [vmem:[%s0 + $0x620] sm:$0xff]
  %v224 = vld [vmem:[%s0 + $0x628] sm:$0xff]
  %v225 = vld [vmem:[%s0 + $0x630] sm:$0xff]
  %v226 = vld [vmem:[%s0 + $0x638] sm:$0xff]
  %v227 = vld [vmem:[%s0 + $0x640] sm:$0xff]
  %v228 = vld [vmem:[%s0 + $0x648] sm:$0xff]
  %v229 = vld [vmem:[%s0 + $0x650] sm:$0xff]
  %v230 = vld [vmem:[%s0 + $0x658] sm:$0xff]
  %v231 = vld [vmem:[%s0 + $0x660] sm:$0xff]
  %v232 = vld [vmem:[%s0 + $0x668] sm:$0xff]
  %v233 = vld [vmem:[%s0 + $0x670] sm:$0xff]
  %v234 = vld [vmem:[%s0 + $0x678] sm:$0xff]
  %v235 = vld [vmem:[%s0 + $0x680] sm:$0xff]
  %v236 = vld [vmem:[%s0 + $0x688] sm:$0xff]
  %v237 = vld [vmem:[%s0 + $0x690] sm:$0xff]
  %v238 = vld [vmem:[%s0 + $0x698] sm:$0xff]
  %v239 = vld [vmem:[%s0 + $0x6a0] sm:$0xff]
  %v240 = vld [vmem:[%s0 + $0x6a8] sm:$0xff]
  %v241 = vld [vmem:[%s0 + $0x6b0] sm:$0xff]
  %v242 = vld [vmem:[%s0 + $0x6b8] sm:$0xff]
  %v243 = vld [vmem:[%s0 + $0x6c0] sm:$0xff]
  %v244 = vld [vmem:[%s0 + $0x6c8] sm:$0xff]
  %v245 = vld [vmem:[%s0 + $0x6d0] sm:$0xff]
  %v246 = vld [vmem:[%s0 + $0x6d8] sm:$0xff]
  %v247 = vld [vmem:[%s0 + $0x6e0] sm:$0xff]
  %v248 = vld [vmem:[%s0 + $0x6e8] sm:$0xff]
  %v249 = vld [vmem:[%s0 + $0x6f0] sm:$0xff]
  %v250 = vld [vmem:[%s0 + $0x6f8] sm:$0xff]
  %v251 = vpack.c.bf16 %v34, %v27
  %v252 = vpack.c.bf16 %v35, %v28
  %v253 = vpack.c.bf16 %v36, %v29
  %v254 = vpack.c.bf16 %v37, %v30
  %v255 = vpack.c.bf16 %v38, %v31
  %v256 = vpack.c.bf16 %v39, %v32
  %v257 = vpack.c.bf16 %v40, %v33
  %v258 = vpack.c.bf16 %v48, %v41
  %v259 = vpack.c.bf16 %v49, %v42
  %v260 = vpack.c.bf16 %v50, %v43
  %v261 = vpack.c.bf16 %v51, %v44
  %v262 = vpack.c.bf16 %v52, %v45
  %v263 = vpack.c.bf16 %v53, %v46
  %v264 = vpack.c.bf16 %v54, %v47
  %v265 = vpack.c.bf16 %v62, %v55
  %v266 = vpack.c.bf16 %v63, %v56
  %v267 = vpack.c.bf16 %v64, %v57
  %v268 = vpack.c.bf16 %v65, %v58
  %v269 = vpack.c.bf16 %v66, %v59
  %v270 = vpack.c.bf16 %v67, %v60
  %v271 = vpack.c.bf16 %v68, %v61
  %v272 = vpack.c.bf16 %v76, %v69
  %v273 = vpack.c.bf16 %v77, %v70
  %v274 = vpack.c.bf16 %v78, %v71
  %v275 = vpack.c.bf16 %v79, %v72
  %v276 = vpack.c.bf16 %v80, %v73
  %v277 = vpack.c.bf16 %v81, %v74
  %v278 = vpack.c.bf16 %v82, %v75
  %v279 = vpack.c.bf16 %v90, %v83
  %v280 = vpack.c.bf16 %v91, %v84
  %v281 = vpack.c.bf16 %v92, %v85
  %v282 = vpack.c.bf16 %v93, %v86
  %v283 = vpack.c.bf16 %v94, %v87
  %v284 = vpack.c.bf16 %v95, %v88
  %v285 = vpack.c.bf16 %v96, %v89
  %v286 = vpack.c.bf16 %v104, %v97
  %v287 = vpack.c.bf16 %v105, %v98
  %v288 = vpack.c.bf16 %v106, %v99
  %v289 = vpack.c.bf16 %v107, %v100
  %v290 = vpack.c.bf16 %v108, %v101
  %v291 = vpack.c.bf16 %v109, %v102
  %v292 = vpack.c.bf16 %v110, %v103
  %v293 = vpack.c.bf16 %v118, %v111
  %v294 = vpack.c.bf16 %v119, %v112
  %v295 = vpack.c.bf16 %v120, %v113
  %v296 = vpack.c.bf16 %v121, %v114
  %v297 = vpack.c.bf16 %v122, %v115
  %v298 = vpack.c.bf16 %v123, %v116
  %v299 = vpack.c.bf16 %v124, %v117
  %v300 = vpack.c.bf16 %v132, %v125
  %v301 = vpack.c.bf16 %v133, %v126
  %v302 = vpack.c.bf16 %v134, %v127
  %v303 = vpack.c.bf16 %v135, %v128
  %v304 = vpack.c.bf16 %v136, %v129
  %v305 = vpack.c.bf16 %v137, %v130
  %v306 = vpack.c.bf16 %v138, %v131
  %v307 = vpack.c.bf16 %v146, %v139
  %v308 = vpack.c.bf16 %v147, %v140
  %v309 = vpack.c.bf16 %v148, %v141
  %v310 = vpack.c.bf16 %v149, %v142
  %v311 = vpack.c.bf16 %v150, %v143
  %v312 = vpack.c.bf16 %v151, %v144
  %v313 = vpack.c.bf16 %v152, %v145
  %v314 = vpack.c.bf16 %v160, %v153
  %v315 = vpack.c.bf16 %v161, %v154
  %v316 = vpack.c.bf16 %v162, %v155
  %v317 = vpack.c.bf16 %v163, %v156
  %v318 = vpack.c.bf16 %v164, %v157
  %v319 = vpack.c.bf16 %v165, %v158
  %v320 = vpack.c.bf16 %v166, %v159
  %v321 = vpack.c.bf16 %v174, %v167
  %v322 = vpack.c.bf16 %v175, %v168
  %v323 = vpack.c.bf16 %v176, %v169
  %v324 = vpack.c.bf16 %v177, %v170
  %v325 = vpack.c.bf16 %v178, %v171
  %v326 = vpack.c.bf16 %v179, %v172
  %v327 = vpack.c.bf16 %v180, %v173
  %v328 = vpack.c.bf16 %v188, %v181
  %v329 = vpack.c.bf16 %v189, %v182
  %v330 = vpack.c.bf16 %v190, %v183
  %v331 = vpack.c.bf16 %v191, %v184
  %v332 = vpack.c.bf16 %v192, %v185
  %v333 = vpack.c.bf16 %v193, %v186
  %v334 = vpack.c.bf16 %v194, %v187
  %v335 = vpack.c.bf16 %v202, %v195
  %v336 = vpack.c.bf16 %v203, %v196
  %v337 = vpack.c.bf16 %v204, %v197
  %v338 = vpack.c.bf16 %v205, %v198
  %v339 = vpack.c.bf16 %v206, %v199
  %v340 = vpack.c.bf16 %v207, %v200
  %v341 = vpack.c.bf16 %v208, %v201
  %v342 = vpack.c.bf16 %v216, %v209
  %v343 = vpack.c.bf16 %v217, %v210
  %v344 = vpack.c.bf16 %v218, %v211
  %v345 = vpack.c.bf16 %v219, %v212
  %v346 = vpack.c.bf16 %v220, %v213
  %v347 = vpack.c.bf16 %v221, %v214
  %v348 = vpack.c.bf16 %v222, %v215
  %v349 = vpack.c.bf16 %v230, %v223
  %v350 = vpack.c.bf16 %v231, %v224
  %v351 = vpack.c.bf16 %v232, %v225
  %v352 = vpack.c.bf16 %v233, %v226
  %v353 = vpack.c.bf16 %v234, %v227
  %v354 = vpack.c.bf16 %v235, %v228
  %v355 = vpack.c.bf16 %v236, %v229
  %v356 = vpack.c.bf16 %v244, %v237
  %v357 = vpack.c.bf16 %v245, %v238
  %v358 = vpack.c.bf16 %v246, %v239
  %v359 = vpack.c.bf16 %v247, %v240
  %v360 = vpack.c.bf16 %v248, %v241
  %v361 = vpack.c.bf16 %v249, %v242
  %v362 = vpack.c.bf16 %v250, %v243
  %v363 = vld [vmem:[%s1] sm:$0xff]
  %v364 = vld [vmem:[%s1 + $0x8] sm:$0xff]
  %v365 = vld [vmem:[%s1 + $0x10] sm:$0xff]
  %v366 = vld [vmem:[%s1 + $0x18] sm:$0xff]
  %v367 = vld [vmem:[%s1 + $0x20] sm:$0xff]
  %v368 = vld [vmem:[%s1 + $0x28] sm:$0xff]
  %v369 = vld [vmem:[%s1 + $0x30] sm:$0xff]
  %v370 = vld [vmem:[%s1 + $0x38] sm:$0xff]
  %v371 = vld [vmem:[%s1 + $0x40] sm:$0xff]
  %v372 = vld [vmem:[%s1 + $0x48] sm:$0xff]
  %v373 = vld [vmem:[%s1 + $0x50] sm:$0xff]
  %v374 = vld [vmem:[%s1 + $0x58] sm:$0xff]
  %v375 = vld [vmem:[%s1 + $0x60] sm:$0xff]
  %v376 = vld [vmem:[%s1 + $0x68] sm:$0xff]
  %v377 = vld [vmem:[%s1 + $0x70] sm:$0xff]
  %v378 = vld [vmem:[%s1 + $0x78] sm:$0xff]
  %v379 = vld [vmem:[%s1 + $0x80] sm:$0xff]
  %v380 = vld [vmem:[%s1 + $0x88] sm:$0xff]
  %v381 = vld [vmem:[%s1 + $0x90] sm:$0xff]
  %v382 = vld [vmem:[%s1 + $0x98] sm:$0xff]
  %v383 = vld [vmem:[%s1 + $0xa0] sm:$0xff]
  %v384 = vld [vmem:[%s1 + $0xa8] sm:$0xff]
  %v385 = vld [vmem:[%s1 + $0xb0] sm:$0xff]
  %v386 = vld [vmem:[%s1 + $0xb8] sm:$0xff]
  %v387 = vld [vmem:[%s1 + $0xc0] sm:$0xff]
  %v388 = vld [vmem:[%s1 + $0xc8] sm:$0xff]
  %v389 = vld [vmem:[%s1 + $0xd0] sm:$0xff]
  %v390 = vld [vmem:[%s1 + $0xd8] sm:$0xff]
  %v391 = vld [vmem:[%s1 + $0xe0] sm:$0xff]
  %v392 = vld [vmem:[%s1 + $0xe8] sm:$0xff]
  %v393 = vld [vmem:[%s1 + $0xf0] sm:$0xff]
  %v394 = vld [vmem:[%s1 + $0xf8] sm:$0xff]
  %v395 = vld [vmem:[%s1 + $0x100] sm:$0xff]
  %v396 = vld [vmem:[%s1 + $0x108] sm:$0xff]
  %v397 = vld [vmem:[%s1 + $0x110] sm:$0xff]
  %v398 = vld [vmem:[%s1 + $0x118] sm:$0xff]
  %v399 = vld [vmem:[%s1 + $0x120] sm:$0xff]
  %v400 = vld [vmem:[%s1 + $0x128] sm:$0xff]
  %v401 = vld [vmem:[%s1 + $0x130] sm:$0xff]
  %v402 = vld [vmem:[%s1 + $0x138] sm:$0xff]
  %v403 = vld [vmem:[%s1 + $0x140] sm:$0xff]
  %v404 = vld [vmem:[%s1 + $0x148] sm:$0xff]
  %v405 = vld [vmem:[%s1 + $0x150] sm:$0xff]
  %v406 = vld [vmem:[%s1 + $0x158] sm:$0xff]
  %v407 = vld [vmem:[%s1 + $0x160] sm:$0xff]
  %v408 = vld [vmem:[%s1 + $0x168] sm:$0xff]
  %v409 = vld [vmem:[%s1 + $0x170] sm:$0xff]
  %v410 = vld [vmem:[%s1 + $0x178] sm:$0xff]
  %v411 = vld [vmem:[%s1 + $0x180] sm:$0xff]
  %v412 = vld [vmem:[%s1 + $0x188] sm:$0xff]
  %v413 = vld [vmem:[%s1 + $0x190] sm:$0xff]
  %v414 = vld [vmem:[%s1 + $0x198] sm:$0xff]
  %v415 = vld [vmem:[%s1 + $0x1a0] sm:$0xff]
  %v416 = vld [vmem:[%s1 + $0x1a8] sm:$0xff]
  %v417 = vld [vmem:[%s1 + $0x1b0] sm:$0xff]
  %v418 = vld [vmem:[%s1 + $0x1b8] sm:$0xff]
  %v419 = vld [vmem:[%s1 + $0x1c0] sm:$0xff]
  %v420 = vld [vmem:[%s1 + $0x1c8] sm:$0xff]
  %v421 = vld [vmem:[%s1 + $0x1d0] sm:$0xff]
  %v422 = vld [vmem:[%s1 + $0x1d8] sm:$0xff]
  %v423 = vld [vmem:[%s1 + $0x1e0] sm:$0xff]
  %v424 = vld [vmem:[%s1 + $0x1e8] sm:$0xff]
  %v425 = vld [vmem:[%s1 + $0x1f0] sm:$0xff]
  %v426 = vld [vmem:[%s1 + $0x1f8] sm:$0xff]
  %v427 = vld [vmem:[%s1 + $0x200] sm:$0xff]
  %v428 = vld [vmem:[%s1 + $0x208] sm:$0xff]
  %v429 = vld [vmem:[%s1 + $0x210] sm:$0xff]
  %v430 = vld [vmem:[%s1 + $0x218] sm:$0xff]
  %v431 = vld [vmem:[%s1 + $0x220] sm:$0xff]
  %v432 = vld [vmem:[%s1 + $0x228] sm:$0xff]
  %v433 = vld [vmem:[%s1 + $0x230] sm:$0xff]
  %v434 = vld [vmem:[%s1 + $0x238] sm:$0xff]
  %v435 = vld [vmem:[%s1 + $0x240] sm:$0xff]
  %v436 = vld [vmem:[%s1 + $0x248] sm:$0xff]
  %v437 = vld [vmem:[%s1 + $0x250] sm:$0xff]
  %v438 = vld [vmem:[%s1 + $0x258] sm:$0xff]
  %v439 = vld [vmem:[%s1 + $0x260] sm:$0xff]
  %v440 = vld [vmem:[%s1 + $0x268] sm:$0xff]
  %v441 = vld [vmem:[%s1 + $0x270] sm:$0xff]
  %v442 = vld [vmem:[%s1 + $0x278] sm:$0xff]
  %v443 = vld [vmem:[%s1 + $0x280] sm:$0xff]
  %v444 = vld [vmem:[%s1 + $0x288] sm:$0xff]
  %v445 = vld [vmem:[%s1 + $0x290] sm:$0xff]
  %v446 = vld [vmem:[%s1 + $0x298] sm:$0xff]
  %v447 = vld [vmem:[%s1 + $0x2a0] sm:$0xff]
  %v448 = vld [vmem:[%s1 + $0x2a8] sm:$0xff]
  %v449 = vld [vmem:[%s1 + $0x2b0] sm:$0xff]
  %v450 = vld [vmem:[%s1 + $0x2b8] sm:$0xff]
  %v451 = vld [vmem:[%s1 + $0x2c0] sm:$0xff]
  %v452 = vld [vmem:[%s1 + $0x2c8] sm:$0xff]
  %v453 = vld [vmem:[%s1 + $0x2d0] sm:$0xff]
  %v454 = vld [vmem:[%s1 + $0x2d8] sm:$0xff]
  %v455 = vld [vmem:[%s1 + $0x2e0] sm:$0xff]
  %v456 = vld [vmem:[%s1 + $0x2e8] sm:$0xff]
  %v457 = vld [vmem:[%s1 + $0x2f0] sm:$0xff]
  %v458 = vld [vmem:[%s1 + $0x2f8] sm:$0xff]
  %v459 = vld [vmem:[%s1 + $0x300] sm:$0xff]
  %v460 = vld [vmem:[%s1 + $0x308] sm:$0xff]
  %v461 = vld [vmem:[%s2] sm:$0x3]
  %v463 = vlaneseq
  %v464 = vshrl.u32 %v463, 7
  %v465 = vsub.s32 0, %v464
  %v466 = vrot.slane %v461, %v465
  %v467 = vlaneseq
  %v468 = vshrl.u32 %v467, 7
  %v469 = vsub.s32 1, %v468
  %v470 = vrot.slane %v461, %v469
  %v571 = vunpack.c.l.b16 %v363
  %v572 = vunpack.c.h.b16 %v363
  %v573 = vunpack.c.l.b16 %v364
  %v574 = vunpack.c.h.b16 %v364
  %v575 = vunpack.c.l.b16 %v365
  %v576 = vunpack.c.h.b16 %v365
  %v577 = vunpack.c.l.b16 %v366
  %v578 = vunpack.c.h.b16 %v366
  %v579 = vunpack.c.l.b16 %v367
  %v580 = vunpack.c.h.b16 %v367
  %v581 = vunpack.c.l.b16 %v368
  %v582 = vunpack.c.h.b16 %v368
  %v583 = vunpack.c.l.b16 %v369
  %v584 = vunpack.c.h.b16 %v369
  %v585 = vunpack.c.l.b16 %v370
  %v586 = vunpack.c.h.b16 %v370
  %v587 = vunpack.c.l.b16 %v371
  %v588 = vunpack.c.h.b16 %v371
  %v589 = vunpack.c.l.b16 %v372
  %v590 = vunpack.c.h.b16 %v372
  %v591 = vunpack.c.l.b16 %v373
  %v592 = vunpack.c.h.b16 %v373
  %v593 = vunpack.c.l.b16 %v374
  %v594 = vunpack.c.h.b16 %v374
  %v595 = vunpack.c.l.b16 %v375
  %v596 = vunpack.c.h.b16 %v375
  %v597 = vunpack.c.l.b16 %v376
  %v598 = vunpack.c.h.b16 %v376
  %v599 = vunpack.c.l.b16 %v377
  %v600 = vunpack.c.h.b16 %v377
  %v601 = vunpack.c.l.b16 %v378
  %v602 = vunpack.c.h.b16 %v378
  %v603 = vunpack.c.l.b16 %v379
  %v604 = vunpack.c.h.b16 %v379
  %v605 = vunpack.c.l.b16 %v380
  %v606 = vunpack.c.h.b16 %v380
  %v607 = vunpack.c.l.b16 %v381
  %v608 = vunpack.c.h.b16 %v381
  %v609 = vunpack.c.l.b16 %v382
  %v610 = vunpack.c.h.b16 %v382
  %v611 = vunpack.c.l.b16 %v383
  %v612 = vunpack.c.h.b16 %v383
  %v613 = vunpack.c.l.b16 %v384
  %v614 = vunpack.c.h.b16 %v384
  %v615 = vunpack.c.l.b16 %v385
  %v616 = vunpack.c.h.b16 %v385
  %v617 = vunpack.c.l.b16 %v386
  %v618 = vunpack.c.h.b16 %v386
  %v619 = vunpack.c.l.b16 %v387
  %v620 = vunpack.c.h.b16 %v387
  %v621 = vunpack.c.l.b16 %v388
  %v622 = vunpack.c.h.b16 %v388
  %v623 = vunpack.c.l.b16 %v389
  %v624 = vunpack.c.h.b16 %v389
  %v625 = vunpack.c.l.b16 %v390
  %v626 = vunpack.c.h.b16 %v390
  %v627 = vunpack.c.l.b16 %v391
  %v628 = vunpack.c.h.b16 %v391
  %v629 = vunpack.c.l.b16 %v392
  %v630 = vunpack.c.h.b16 %v392
  %v631 = vunpack.c.l.b16 %v393
  %v632 = vunpack.c.h.b16 %v393
  %v633 = vunpack.c.l.b16 %v394
  %v634 = vunpack.c.h.b16 %v394
  %v635 = vunpack.c.l.b16 %v395
  %v636 = vunpack.c.h.b16 %v395
  %v637 = vunpack.c.l.b16 %v396
  %v638 = vunpack.c.h.b16 %v396
  %v639 = vunpack.c.l.b16 %v397
  %v640 = vunpack.c.h.b16 %v397
  %v641 = vunpack.c.l.b16 %v398
  %v642 = vunpack.c.h.b16 %v398
  %v643 = vunpack.c.l.b16 %v399
  %v644 = vunpack.c.h.b16 %v399
  %v645 = vunpack.c.l.b16 %v400
  %v646 = vunpack.c.h.b16 %v400
  %v647 = vunpack.c.l.b16 %v401
  %v648 = vunpack.c.h.b16 %v401
  %v649 = vunpack.c.l.b16 %v402
  %v650 = vunpack.c.h.b16 %v402
  %v651 = vunpack.c.l.b16 %v403
  %v652 = vunpack.c.h.b16 %v403
  %v653 = vunpack.c.l.b16 %v404
  %v654 = vunpack.c.h.b16 %v404
  %v655 = vunpack.c.l.b16 %v405
  %v656 = vunpack.c.h.b16 %v405
  %v657 = vunpack.c.l.b16 %v406
  %v658 = vunpack.c.h.b16 %v406
  %v659 = vunpack.c.l.b16 %v407
  %v660 = vunpack.c.h.b16 %v407
  %v661 = vunpack.c.l.b16 %v408
  %v662 = vunpack.c.h.b16 %v408
  %v663 = vunpack.c.l.b16 %v409
  %v664 = vunpack.c.h.b16 %v409
  %v665 = vunpack.c.l.b16 %v410
  %v666 = vunpack.c.h.b16 %v410
  %v667 = vunpack.c.l.b16 %v411
  %v668 = vunpack.c.h.b16 %v411
  %v669 = vunpack.c.l.b16 %v412
  %v670 = vunpack.c.h.b16 %v412
  %v671 = vunpack.c.l.b16 %v413
  %v672 = vunpack.c.h.b16 %v413
  %v673 = vunpack.c.l.b16 %v414
  %v674 = vunpack.c.h.b16 %v414
  %v675 = vunpack.c.l.b16 %v415
  %v676 = vunpack.c.h.b16 %v415
  %v677 = vunpack.c.l.b16 %v416
  %v678 = vunpack.c.h.b16 %v416
  %v679 = vunpack.c.l.b16 %v417
  %v680 = vunpack.c.h.b16 %v417
  %v681 = vunpack.c.l.b16 %v418
  %v682 = vunpack.c.h.b16 %v418
  %v683 = vunpack.c.l.b16 %v419
  %v684 = vunpack.c.h.b16 %v419
  %v685 = vunpack.c.l.b16 %v420
  %v686 = vunpack.c.h.b16 %v420
  %v687 = vunpack.c.l.b16 %v421
  %v688 = vunpack.c.h.b16 %v421
  %v689 = vunpack.c.l.b16 %v422
  %v690 = vunpack.c.h.b16 %v422
  %v691 = vunpack.c.l.b16 %v423
  %v692 = vunpack.c.h.b16 %v423
  %v693 = vunpack.c.l.b16 %v424
  %v694 = vunpack.c.h.b16 %v424
  %v695 = vunpack.c.l.b16 %v425
  %v696 = vunpack.c.h.b16 %v425
  %v697 = vunpack.c.l.b16 %v426
  %v698 = vunpack.c.h.b16 %v426
  %v699 = vunpack.c.l.b16 %v427
  %v700 = vunpack.c.h.b16 %v427
  %v701 = vunpack.c.l.b16 %v428
  %v702 = vunpack.c.h.b16 %v428
  %v703 = vunpack.c.l.b16 %v429
  %v704 = vunpack.c.h.b16 %v429
  %v705 = vunpack.c.l.b16 %v430
  %v706 = vunpack.c.h.b16 %v430
  %v707 = vunpack.c.l.b16 %v431
  %v708 = vunpack.c.h.b16 %v431
  %v709 = vunpack.c.l.b16 %v432
  %v710 = vunpack.c.h.b16 %v432
  %v711 = vunpack.c.l.b16 %v433
  %v712 = vunpack.c.h.b16 %v433
  %v713 = vunpack.c.l.b16 %v434
  %v714 = vunpack.c.h.b16 %v434
  %v715 = vunpack.c.l.b16 %v435
  %v716 = vunpack.c.h.b16 %v435
  %v717 = vunpack.c.l.b16 %v436
  %v718 = vunpack.c.h.b16 %v436
  %v719 = vunpack.c.l.b16 %v437
  %v720 = vunpack.c.h.b16 %v437
  %v721 = vunpack.c.l.b16 %v438
  %v722 = vunpack.c.h.b16 %v438
  %v723 = vunpack.c.l.b16 %v439
  %v724 = vunpack.c.h.b16 %v439
  %v725 = vunpack.c.l.b16 %v440
  %v726 = vunpack.c.h.b16 %v440
  %v727 = vunpack.c.l.b16 %v441
  %v728 = vunpack.c.h.b16 %v441
  %v729 = vunpack.c.l.b16 %v442
  %v730 = vunpack.c.h.b16 %v442
  %v731 = vunpack.c.l.b16 %v443
  %v732 = vunpack.c.h.b16 %v443
  %v733 = vunpack.c.l.b16 %v444
  %v734 = vunpack.c.h.b16 %v444
  %v735 = vunpack.c.l.b16 %v445
  %v736 = vunpack.c.h.b16 %v445
  %v737 = vunpack.c.l.b16 %v446
  %v738 = vunpack.c.h.b16 %v446
  %v739 = vunpack.c.l.b16 %v447
  %v740 = vunpack.c.h.b16 %v447
  %v741 = vunpack.c.l.b16 %v448
  %v742 = vunpack.c.h.b16 %v448
  %v743 = vunpack.c.l.b16 %v449
  %v744 = vunpack.c.h.b16 %v449
  %v745 = vunpack.c.l.b16 %v450
  %v746 = vunpack.c.h.b16 %v450
  %v747 = vunpack.c.l.b16 %v451
  %v748 = vunpack.c.h.b16 %v451
  %v749 = vunpack.c.l.b16 %v452
  %v750 = vunpack.c.h.b16 %v452
  %v751 = vunpack.c.l.b16 %v453
  %v752 = vunpack.c.h.b16 %v453
  %v753 = vunpack.c.l.b16 %v454
  %v754 = vunpack.c.h.b16 %v454
  %v755 = vunpack.c.l.b16 %v455
  %v756 = vunpack.c.h.b16 %v455
  %v757 = vunpack.c.l.b16 %v456
  %v758 = vunpack.c.h.b16 %v456
  %v759 = vunpack.c.l.b16 %v457
  %v760 = vunpack.c.h.b16 %v457
  %v761 = vunpack.c.l.b16 %v458
  %v762 = vunpack.c.h.b16 %v458
  %v763 = vunpack.c.l.b16 %v459
  %v764 = vunpack.c.h.b16 %v459
  %v765 = vunpack.c.l.b16 %v460
  %v766 = vunpack.c.h.b16 %v460
  %v767 = vpack.c.b16 %v573, %v571
  %v768 = vpack.c.b16 %v574, %v572
  %v769 = vpack.c.b16 %v577, %v575
  %v770 = vpack.c.b16 %v578, %v576
  %v771 = vpack.c.b16 %v581, %v579
  %v772 = vpack.c.b16 %v582, %v580
  %v773 = vpack.c.b16 %v585, %v583
  %v774 = vpack.c.b16 %v586, %v584
  %v775 = vpack.c.b16 %v589, %v587
  %v776 = vpack.c.b16 %v590, %v588
  %v777 = vpack.c.b16 %v593, %v591
  %v778 = vpack.c.b16 %v594, %v592
  %v779 = vpack.c.b16 %v597, %v595
  %v780 = vpack.c.b16 %v598, %v596
  %v781 = vpack.c.b16 %v601, %v599
  %v782 = vpack.c.b16 %v602, %v600
  %v783 = vpack.c.b16 %v605, %v603
  %v784 = vpack.c.b16 %v606, %v604
  %v785 = vpack.c.b16 %v609, %v607
  %v786 = vpack.c.b16 %v610, %v608
  %v787 = vpack.c.b16 %v613, %v611
  %v788 = vpack.c.b16 %v614, %v612
  %v789 = vpack.c.b16 %v617, %v615
  %v790 = vpack.c.b16 %v618, %v616
  %v791 = vpack.c.b16 %v621, %v619
  %v792 = vpack.c.b16 %v622, %v620
  %v793 = vpack.c.b16 %v625, %v623
  %v794 = vpack.c.b16 %v626, %v624
  %v795 = vpack.c.b16 %v629, %v627
  %v796 = vpack.c.b16 %v630, %v628
  %v797 = vpack.c.b16 %v633, %v631
  %v798 = vpack.c.b16 %v634, %v632
  %v799 = vpack.c.b16 %v637, %v635
  %v800 = vpack.c.b16 %v638, %v636
  %v801 = vpack.c.b16 %v641, %v639
  %v802 = vpack.c.b16 %v642, %v640
  %v803 = vpack.c.b16 %v645, %v643
  %v804 = vpack.c.b16 %v646, %v644
  %v805 = vpack.c.b16 %v649, %v647
  %v806 = vpack.c.b16 %v650, %v648
  %v807 = vpack.c.b16 %v653, %v651
  %v808 = vpack.c.b16 %v654, %v652
  %v809 = vpack.c.b16 %v657, %v655
  %v810 = vpack.c.b16 %v658, %v656
  %v811 = vpack.c.b16 %v661, %v659
  %v812 = vpack.c.b16 %v662, %v660
  %v813 = vpack.c.b16 %v665, %v663
  %v814 = vpack.c.b16 %v666, %v664
  %v815 = vpack.c.b16 %v669, %v667
  %v816 = vpack.c.b16 %v670, %v668
  %v817 = vpack.c.b16 %v673, %v671
  %v818 = vpack.c.b16 %v674, %v672
  %v819 = vpack.c.b16 %v677, %v675
  %v820 = vpack.c.b16 %v678, %v676
  %v821 = vpack.c.b16 %v681, %v679
  %v822 = vpack.c.b16 %v682, %v680
  %v823 = vpack.c.b16 %v685, %v683
  %v824 = vpack.c.b16 %v686, %v684
  %v825 = vpack.c.b16 %v689, %v687
  %v826 = vpack.c.b16 %v690, %v688
  %v827 = vpack.c.b16 %v693, %v691
  %v828 = vpack.c.b16 %v694, %v692
  %v829 = vpack.c.b16 %v697, %v695
  %v830 = vpack.c.b16 %v698, %v696
  %v831 = vpack.c.b16 %v701, %v699
  %v832 = vpack.c.b16 %v702, %v700
  %v833 = vpack.c.b16 %v705, %v703
  %v834 = vpack.c.b16 %v706, %v704
  %v835 = vpack.c.b16 %v709, %v707
  %v836 = vpack.c.b16 %v710, %v708
  %v837 = vpack.c.b16 %v713, %v711
  %v838 = vpack.c.b16 %v714, %v712
  %v839 = vpack.c.b16 %v717, %v715
  %v840 = vpack.c.b16 %v718, %v716
  %v841 = vpack.c.b16 %v721, %v719
  %v842 = vpack.c.b16 %v722, %v720
  %v843 = vpack.c.b16 %v725, %v723
  %v844 = vpack.c.b16 %v726, %v724
  %v845 = vpack.c.b16 %v729, %v727
  %v846 = vpack.c.b16 %v730, %v728
  %v847 = vpack.c.b16 %v733, %v731
  %v848 = vpack.c.b16 %v734, %v732
  %v849 = vpack.c.b16 %v737, %v735
  %v850 = vpack.c.b16 %v738, %v736
  %v851 = vpack.c.b16 %v741, %v739
  %v852 = vpack.c.b16 %v742, %v740
  %v853 = vpack.c.b16 %v745, %v743
  %v854 = vpack.c.b16 %v746, %v744
  %v855 = vpack.c.b16 %v749, %v747
  %v856 = vpack.c.b16 %v750, %v748
  %v857 = vpack.c.b16 %v753, %v751
  %v858 = vpack.c.b16 %v754, %v752
  %v859 = vpack.c.b16 %v757, %v755
  %v860 = vpack.c.b16 %v758, %v756
  %v861 = vpack.c.b16 %v761, %v759
  %v862 = vpack.c.b16 %v762, %v760
  %v863 = vpack.c.b16 %v765, %v763
  %v864 = vpack.c.b16 %v766, %v764
  %vm963 = vcmask 130048
  %v965 = vsel %vm963, %v257, 0
  %v968 = vsel %vm963, %v264, 0
  %v971 = vsel %vm963, %v271, 0
  %v974 = vsel %vm963, %v278, 0
  %v977 = vsel %vm963, %v285, 0
  %v980 = vsel %vm963, %v292, 0
  %v983 = vsel %vm963, %v299, 0
  %v986 = vsel %vm963, %v306, 0
  %v989 = vsel %vm963, %v313, 0
  %v992 = vsel %vm963, %v320, 0
  %v995 = vsel %vm963, %v327, 0
  %v998 = vsel %vm963, %v334, 0
  %v1001 = vsel %vm963, %v341, 0
  %v1004 = vsel %vm963, %v348, 0
  %v1007 = vsel %vm963, %v355, 0
  %v1010 = vsel %vm963, %v362, 0
  %1012 = vmatprep.subr.bf16.mxu0 %v782
  %1013 = vmatpush1.bf16.msra.mxu0 %v781
  %1014 = vmatprep.subr.bf16.mxu0 %v780
  %1015 = vmatpush1.bf16.msra.mxu0 %v779
  %1016 = vmatprep.subr.bf16.mxu0 %v778
  %1017 = vmatpush1.bf16.msra.mxu0 %v777
  %1018 = vmatprep.subr.bf16.mxu0 %v776
  %1019 = vmatpush1.bf16.msra.mxu0 %v775
  %1020 = vmatprep.subr.bf16.mxu0 %v774
  %1021 = vmatpush1.bf16.msra.mxu0 %v773
  %1022 = vmatprep.subr.bf16.mxu0 %v772
  %1023 = vmatpush1.bf16.msra.mxu0 %v771
  %1024 = vmatprep.subr.bf16.mxu0 %v770
  %1025 = vmatpush1.bf16.msra.mxu0 %v769
  %1026 = vmatprep.subr.bf16.mxu0 %v768
  %1027 = vmatpush1.bf16.msra.mxu0 %v767
  %1028 = vmatprep.subr.bf16.mxu0 %v798
  %1029 = vmatpush2.bf16.msra.mxu0 %v797
  %1030 = vmatprep.subr.bf16.mxu0 %v796
  %1031 = vmatpush2.bf16.msra.mxu0 %v795
  %1032 = vmatprep.subr.bf16.mxu0 %v794
  %1033 = vmatpush2.bf16.msra.mxu0 %v793
  %1034 = vmatprep.subr.bf16.mxu0 %v792
  %1035 = vmatpush2.bf16.msra.mxu0 %v791
  %1036 = vmatprep.subr.bf16.mxu0 %v790
  %1037 = vmatpush2.bf16.msra.mxu0 %v789
  %1038 = vmatprep.subr.bf16.mxu0 %v788
  %1039 = vmatpush2.bf16.msra.mxu0 %v787
  %1040 = vmatprep.subr.bf16.mxu0 %v786
  %1041 = vmatpush2.bf16.msra.mxu0 %v785
  %1042 = vmatprep.subr.bf16.mxu0 %v784
  %1043 = vmatpush2.bf16.msra.mxu0 %v783
  %1044 = vmatprep.mubr.bf16.mxu0 %v252
  %1045 = vmatmul.mubr.bf16.gmra.mxu0 %v251
  %v1046 = vpop.f32.mrf.mxu0
  %v1047 = vadd.f32 %v466, %v1046
  %v1048 = vpop.f32.mrf.mxu0
  %v1049 = vadd.f32 %v470, %v1048
  %v1050 = vpop.f32.mrf.mxu0
  %v1051 = vadd.f32 %v466, %v1050
  %v1052 = vpop.f32.mrf.mxu0
  %v1053 = vadd.f32 %v470, %v1052
  %1054 = vmatprep.mubr.bf16.mxu0 %v259
  %1055 = vmatmul.mubr.bf16.gmra.mxu0 %v258
  %v1056 = vpop.f32.mrf.mxu0
  %v1057 = vadd.f32 %v466, %v1056
  %v1058 = vpop.f32.mrf.mxu0
  %v1059 = vadd.f32 %v470, %v1058
  %v1060 = vpop.f32.mrf.mxu0
  %v1061 = vadd.f32 %v466, %v1060
  %v1062 = vpop.f32.mrf.mxu0
  %v1063 = vadd.f32 %v470, %v1062
  %1064 = vmatprep.mubr.bf16.mxu0 %v266
  %1065 = vmatmul.mubr.bf16.gmra.mxu0 %v265
  %v1066 = vpop.f32.mrf.mxu0
  %v1067 = vadd.f32 %v466, %v1066
  %v1068 = vpop.f32.mrf.mxu0
  %v1069 = vadd.f32 %v470, %v1068
  %v1070 = vpop.f32.mrf.mxu0
  %v1071 = vadd.f32 %v466, %v1070
  %v1072 = vpop.f32.mrf.mxu0
  %v1073 = vadd.f32 %v470, %v1072
  %1074 = vmatprep.mubr.bf16.mxu0 %v273
  %1075 = vmatmul.mubr.bf16.gmra.mxu0 %v272
  %v1076 = vpop.f32.mrf.mxu0
  %v1077 = vadd.f32 %v466, %v1076
  %v1078 = vpop.f32.mrf.mxu0
  %v1079 = vadd.f32 %v470, %v1078
  %v1080 = vpop.f32.mrf.mxu0
  %v1081 = vadd.f32 %v466, %v1080
  %v1082 = vpop.f32.mrf.mxu0
  %v1083 = vadd.f32 %v470, %v1082
  %1084 = vmatprep.mubr.bf16.mxu0 %v280
  %1085 = vmatmul.mubr.bf16.gmra.mxu0 %v279
  %v1086 = vpop.f32.mrf.mxu0
  %v1087 = vadd.f32 %v466, %v1086
  %v1088 = vpop.f32.mrf.mxu0
  %v1089 = vadd.f32 %v470, %v1088
  %v1090 = vpop.f32.mrf.mxu0
  %v1091 = vadd.f32 %v466, %v1090
  %v1092 = vpop.f32.mrf.mxu0
  %v1093 = vadd.f32 %v470, %v1092
  %1094 = vmatprep.mubr.bf16.mxu0 %v287
  %1095 = vmatmul.mubr.bf16.gmra.mxu0 %v286
  %v1096 = vpop.f32.mrf.mxu0
  %v1097 = vadd.f32 %v466, %v1096
  %v1098 = vpop.f32.mrf.mxu0
  %v1099 = vadd.f32 %v470, %v1098
  %v1100 = vpop.f32.mrf.mxu0
  %v1101 = vadd.f32 %v466, %v1100
  %v1102 = vpop.f32.mrf.mxu0
  %v1103 = vadd.f32 %v470, %v1102
  %1104 = vmatprep.mubr.bf16.mxu0 %v294
  %1105 = vmatmul.mubr.bf16.gmra.mxu0 %v293
  %v1106 = vpop.f32.mrf.mxu0
  %v1107 = vadd.f32 %v466, %v1106
  %v1108 = vpop.f32.mrf.mxu0
  %v1109 = vadd.f32 %v470, %v1108
  %v1110 = vpop.f32.mrf.mxu0
  %v1111 = vadd.f32 %v466, %v1110
  %v1112 = vpop.f32.mrf.mxu0
  %v1113 = vadd.f32 %v470, %v1112
  %1114 = vmatprep.mubr.bf16.mxu0 %v301
  %1115 = vmatmul.mubr.bf16.gmra.mxu0 %v300
  %v1116 = vpop.f32.mrf.mxu0
  %v1117 = vadd.f32 %v466, %v1116
  %v1118 = vpop.f32.mrf.mxu0
  %v1119 = vadd.f32 %v470, %v1118
  %v1120 = vpop.f32.mrf.mxu0
  %v1121 = vadd.f32 %v466, %v1120
  %v1122 = vpop.f32.mrf.mxu0
  %v1123 = vadd.f32 %v470, %v1122
  %1124 = vmatprep.mubr.bf16.mxu0 %v308
  %1125 = vmatmul.mubr.bf16.gmra.mxu0 %v307
  %v1126 = vpop.f32.mrf.mxu0
  %v1127 = vadd.f32 %v466, %v1126
  %v1128 = vpop.f32.mrf.mxu0
  %v1129 = vadd.f32 %v470, %v1128
  %v1130 = vpop.f32.mrf.mxu0
  %v1131 = vadd.f32 %v466, %v1130
  %v1132 = vpop.f32.mrf.mxu0
  %v1133 = vadd.f32 %v470, %v1132
  %1134 = vmatprep.mubr.bf16.mxu0 %v315
  %1135 = vmatmul.mubr.bf16.gmra.mxu0 %v314
  %v1136 = vpop.f32.mrf.mxu0
  %v1137 = vadd.f32 %v466, %v1136
  %v1138 = vpop.f32.mrf.mxu0
  %v1139 = vadd.f32 %v470, %v1138
  %v1140 = vpop.f32.mrf.mxu0
  %v1141 = vadd.f32 %v466, %v1140
  %v1142 = vpop.f32.mrf.mxu0
  %v1143 = vadd.f32 %v470, %v1142
  %1144 = vmatprep.mubr.bf16.mxu0 %v322
  %1145 = vmatmul.mubr.bf16.gmra.mxu0 %v321
  %v1146 = vpop.f32.mrf.mxu0
  %v1147 = vadd.f32 %v466, %v1146
  %v1148 = vpop.f32.mrf.mxu0
  %v1149 = vadd.f32 %v470, %v1148
  %v1150 = vpop.f32.mrf.mxu0
  %v1151 = vadd.f32 %v466, %v1150
  %v1152 = vpop.f32.mrf.mxu0
  %v1153 = vadd.f32 %v470, %v1152
  %1154 = vmatprep.mubr.bf16.mxu0 %v329
  %1155 = vmatmul.mubr.bf16.gmra.mxu0 %v328
  %v1156 = vpop.f32.mrf.mxu0
  %v1157 = vadd.f32 %v466, %v1156
  %v1158 = vpop.f32.mrf.mxu0
  %v1159 = vadd.f32 %v470, %v1158
  %v1160 = vpop.f32.mrf.mxu0
  %v1161 = vadd.f32 %v466, %v1160
  %v1162 = vpop.f32.mrf.mxu0
  %v1163 = vadd.f32 %v470, %v1162
  %1164 = vmatprep.mubr.bf16.mxu0 %v336
  %1165 = vmatmul.mubr.bf16.gmra.mxu0 %v335
  %v1166 = vpop.f32.mrf.mxu0
  %v1167 = vadd.f32 %v466, %v1166
  %v1168 = vpop.f32.mrf.mxu0
  %v1169 = vadd.f32 %v470, %v1168
  %v1170 = vpop.f32.mrf.mxu0
  %v1171 = vadd.f32 %v466, %v1170
  %v1172 = vpop.f32.mrf.mxu0
  %v1173 = vadd.f32 %v470, %v1172
  %1174 = vmatprep.mubr.bf16.mxu0 %v343
  %1175 = vmatmul.mubr.bf16.gmra.mxu0 %v342
  %v1176 = vpop.f32.mrf.mxu0
  %v1177 = vadd.f32 %v466, %v1176
  %v1178 = vpop.f32.mrf.mxu0
  %v1179 = vadd.f32 %v470, %v1178
  %v1180 = vpop.f32.mrf.mxu0
  %v1181 = vadd.f32 %v466, %v1180
  %v1182 = vpop.f32.mrf.mxu0
  %v1183 = vadd.f32 %v470, %v1182
  %1184 = vmatprep.mubr.bf16.mxu0 %v350
  %1185 = vmatmul.mubr.bf16.gmra.mxu0 %v349
  %v1186 = vpop.f32.mrf.mxu0
  %v1187 = vadd.f32 %v466, %v1186
  %v1188 = vpop.f32.mrf.mxu0
  %v1189 = vadd.f32 %v470, %v1188
  %v1190 = vpop.f32.mrf.mxu0
  %v1191 = vadd.f32 %v466, %v1190
  %v1192 = vpop.f32.mrf.mxu0
  %v1193 = vadd.f32 %v470, %v1192
  %1194 = vmatprep.mubr.bf16.mxu0 %v357
  %1195 = vmatmul.mubr.bf16.gmra.mxu0 %v356
  %v1196 = vpop.f32.mrf.mxu0
  %v1197 = vadd.f32 %v466, %v1196
  %v1198 = vpop.f32.mrf.mxu0
  %v1199 = vadd.f32 %v470, %v1198
  %v1200 = vpop.f32.mrf.mxu0
  %v1201 = vadd.f32 %v466, %v1200
  %v1202 = vpop.f32.mrf.mxu0
  %v1203 = vadd.f32 %v470, %v1202
  %1204 = vdwg.mxu0
  %1205 = vmatprep.subr.bf16.mxu0 %v814
  %1206 = vmatpush1.bf16.msra.mxu0 %v813
  %1207 = vmatprep.subr.bf16.mxu0 %v812
  %1208 = vmatpush1.bf16.msra.mxu0 %v811
  %1209 = vmatprep.subr.bf16.mxu0 %v810
  %1210 = vmatpush1.bf16.msra.mxu0 %v809
  %1211 = vmatprep.subr.bf16.mxu0 %v808
  %1212 = vmatpush1.bf16.msra.mxu0 %v807
  %1213 = vmatprep.subr.bf16.mxu0 %v806
  %1214 = vmatpush1.bf16.msra.mxu0 %v805
  %1215 = vmatprep.subr.bf16.mxu0 %v804
  %1216 = vmatpush1.bf16.msra.mxu0 %v803
  %1217 = vmatprep.subr.bf16.mxu0 %v802
  %1218 = vmatpush1.bf16.msra.mxu0 %v801
  %1219 = vmatprep.subr.bf16.mxu0 %v800
  %1220 = vmatpush1.bf16.msra.mxu0 %v799
  %1221 = vmatprep.subr.bf16.mxu0 %v830
  %1222 = vmatpush2.bf16.msra.mxu0 %v829
  %1223 = vmatprep.subr.bf16.mxu0 %v828
  %1224 = vmatpush2.bf16.msra.mxu0 %v827
  %1225 = vmatprep.subr.bf16.mxu0 %v826
  %1226 = vmatpush2.bf16.msra.mxu0 %v825
  %1227 = vmatprep.subr.bf16.mxu0 %v824
  %1228 = vmatpush2.bf16.msra.mxu0 %v823
  %1229 = vmatprep.subr.bf16.mxu0 %v822
  %1230 = vmatpush2.bf16.msra.mxu0 %v821
  %1231 = vmatprep.subr.bf16.mxu0 %v820
  %1232 = vmatpush2.bf16.msra.mxu0 %v819
  %1233 = vmatprep.subr.bf16.mxu0 %v818
  %1234 = vmatpush2.bf16.msra.mxu0 %v817
  %1235 = vmatprep.subr.bf16.mxu0 %v816
  %1236 = vmatpush2.bf16.msra.mxu0 %v815
  %1237 = vmatprep.mubr.bf16.mxu0 %v254
  %1238 = vmatmul.mubr.bf16.gmra.mxu0 %v253
  %v1239 = vpop.f32.mrf.mxu0
  %v1240 = vadd.f32 %v1047, %v1239
  %v1241 = vpop.f32.mrf.mxu0
  %v1242 = vadd.f32 %v1049, %v1241
  %v1243 = vpop.f32.mrf.mxu0
  %v1244 = vadd.f32 %v1051, %v1243
  %v1245 = vpop.f32.mrf.mxu0
  %v1246 = vadd.f32 %v1053, %v1245
  %1247 = vmatprep.mubr.bf16.mxu0 %v261
  %1248 = vmatmul.mubr.bf16.gmra.mxu0 %v260
  %v1249 = vpop.f32.mrf.mxu0
  %v1250 = vadd.f32 %v1057, %v1249
  %v1251 = vpop.f32.mrf.mxu0
  %v1252 = vadd.f32 %v1059, %v1251
  %v1253 = vpop.f32.mrf.mxu0
  %v1254 = vadd.f32 %v1061, %v1253
  %v1255 = vpop.f32.mrf.mxu0
  %v1256 = vadd.f32 %v1063, %v1255
  %1257 = vmatprep.mubr.bf16.mxu0 %v268
  %1258 = vmatmul.mubr.bf16.gmra.mxu0 %v267
  %v1259 = vpop.f32.mrf.mxu0
  %v1260 = vadd.f32 %v1067, %v1259
  %v1261 = vpop.f32.mrf.mxu0
  %v1262 = vadd.f32 %v1069, %v1261
  %v1263 = vpop.f32.mrf.mxu0
  %v1264 = vadd.f32 %v1071, %v1263
  %v1265 = vpop.f32.mrf.mxu0
  %v1266 = vadd.f32 %v1073, %v1265
  %1267 = vmatprep.mubr.bf16.mxu0 %v275
  %1268 = vmatmul.mubr.bf16.gmra.mxu0 %v274
  %v1269 = vpop.f32.mrf.mxu0
  %v1270 = vadd.f32 %v1077, %v1269
  %v1271 = vpop.f32.mrf.mxu0
  %v1272 = vadd.f32 %v1079, %v1271
  %v1273 = vpop.f32.mrf.mxu0
  %v1274 = vadd.f32 %v1081, %v1273
  %v1275 = vpop.f32.mrf.mxu0
  %v1276 = vadd.f32 %v1083, %v1275
  %1277 = vmatprep.mubr.bf16.mxu0 %v282
  %1278 = vmatmul.mubr.bf16.gmra.mxu0 %v281
  %v1279 = vpop.f32.mrf.mxu0
  %v1280 = vadd.f32 %v1087, %v1279
  %v1281 = vpop.f32.mrf.mxu0
  %v1282 = vadd.f32 %v1089, %v1281
  %v1283 = vpop.f32.mrf.mxu0
  %v1284 = vadd.f32 %v1091, %v1283
  %v1285 = vpop.f32.mrf.mxu0
  %v1286 = vadd.f32 %v1093, %v1285
  %1287 = vmatprep.mubr.bf16.mxu0 %v289
  %1288 = vmatmul.mubr.bf16.gmra.mxu0 %v288
  %v1289 = vpop.f32.mrf.mxu0
  %v1290 = vadd.f32 %v1097, %v1289
  %v1291 = vpop.f32.mrf.mxu0
  %v1292 = vadd.f32 %v1099, %v1291
  %v1293 = vpop.f32.mrf.mxu0
  %v1294 = vadd.f32 %v1101, %v1293
  %v1295 = vpop.f32.mrf.mxu0
  %v1296 = vadd.f32 %v1103, %v1295
  %1297 = vmatprep.mubr.bf16.mxu0 %v296
  %1298 = vmatmul.mubr.bf16.gmra.mxu0 %v295
  %v1299 = vpop.f32.mrf.mxu0
  %v1300 = vadd.f32 %v1107, %v1299
  %v1301 = vpop.f32.mrf.mxu0
  %v1302 = vadd.f32 %v1109, %v1301
  %v1303 = vpop.f32.mrf.mxu0
  %v1304 = vadd.f32 %v1111, %v1303
  %v1305 = vpop.f32.mrf.mxu0
  %v1306 = vadd.f32 %v1113, %v1305
  %1307 = vmatprep.mubr.bf16.mxu0 %v303
  %1308 = vmatmul.mubr.bf16.gmra.mxu0 %v302
  %v1309 = vpop.f32.mrf.mxu0
  %v1310 = vadd.f32 %v1117, %v1309
  %v1311 = vpop.f32.mrf.mxu0
  %v1312 = vadd.f32 %v1119, %v1311
  %v1313 = vpop.f32.mrf.mxu0
  %v1314 = vadd.f32 %v1121, %v1313
  %v1315 = vpop.f32.mrf.mxu0
  %v1316 = vadd.f32 %v1123, %v1315
  %1317 = vmatprep.mubr.bf16.mxu0 %v310
  %1318 = vmatmul.mubr.bf16.gmra.mxu0 %v309
  %v1319 = vpop.f32.mrf.mxu0
  %v1320 = vadd.f32 %v1127, %v1319
  %v1321 = vpop.f32.mrf.mxu0
  %v1322 = vadd.f32 %v1129, %v1321
  %v1323 = vpop.f32.mrf.mxu0
  %v1324 = vadd.f32 %v1131, %v1323
  %v1325 = vpop.f32.mrf.mxu0
  %v1326 = vadd.f32 %v1133, %v1325
  %1327 = vmatprep.mubr.bf16.mxu0 %v317
  %1328 = vmatmul.mubr.bf16.gmra.mxu0 %v316
  %v1329 = vpop.f32.mrf.mxu0
  %v1330 = vadd.f32 %v1137, %v1329
  %v1331 = vpop.f32.mrf.mxu0
  %v1332 = vadd.f32 %v1139, %v1331
  %v1333 = vpop.f32.mrf.mxu0
  %v1334 = vadd.f32 %v1141, %v1333
  %v1335 = vpop.f32.mrf.mxu0
  %v1336 = vadd.f32 %v1143, %v1335
  %1337 = vmatprep.mubr.bf16.mxu0 %v324
  %1338 = vmatmul.mubr.bf16.gmra.mxu0 %v323
  %v1339 = vpop.f32.mrf.mxu0
  %v1340 = vadd.f32 %v1147, %v1339
  %v1341 = vpop.f32.mrf.mxu0
  %v1342 = vadd.f32 %v1149, %v1341
  %v1343 = vpop.f32.mrf.mxu0
  %v1344 = vadd.f32 %v1151, %v1343
  %v1345 = vpop.f32.mrf.mxu0
  %v1346 = vadd.f32 %v1153, %v1345
  %1347 = vmatprep.mubr.bf16.mxu0 %v331
  %1348 = vmatmul.mubr.bf16.gmra.mxu0 %v330
  %v1349 = vpop.f32.mrf.mxu0
  %v1350 = vadd.f32 %v1157, %v1349
  %v1351 = vpop.f32.mrf.mxu0
  %v1352 = vadd.f32 %v1159, %v1351
  %v1353 = vpop.f32.mrf.mxu0
  %v1354 = vadd.f32 %v1161, %v1353
  %v1355 = vpop.f32.mrf.mxu0
  %v1356 = vadd.f32 %v1163, %v1355
  %1357 = vmatprep.mubr.bf16.mxu0 %v338
  %1358 = vmatmul.mubr.bf16.gmra.mxu0 %v337
  %v1359 = vpop.f32.mrf.mxu0
  %v1360 = vadd.f32 %v1167, %v1359
  %v1361 = vpop.f32.mrf.mxu0
  %v1362 = vadd.f32 %v1169, %v1361
  %v1363 = vpop.f32.mrf.mxu0
  %v1364 = vadd.f32 %v1171, %v1363
  %v1365 = vpop.f32.mrf.mxu0
  %v1366 = vadd.f32 %v1173, %v1365
  %1367 = vmatprep.mubr.bf16.mxu0 %v345
  %1368 = vmatmul.mubr.bf16.gmra.mxu0 %v344
  %v1369 = vpop.f32.mrf.mxu0
  %v1370 = vadd.f32 %v1177, %v1369
  %v1371 = vpop.f32.mrf.mxu0
  %v1372 = vadd.f32 %v1179, %v1371
  %v1373 = vpop.f32.mrf.mxu0
  %v1374 = vadd.f32 %v1181, %v1373
  %v1375 = vpop.f32.mrf.mxu0
  %v1376 = vadd.f32 %v1183, %v1375
  %1377 = vmatprep.mubr.bf16.mxu0 %v352
  %1378 = vmatmul.mubr.bf16.gmra.mxu0 %v351
  %v1379 = vpop.f32.mrf.mxu0
  %v1380 = vadd.f32 %v1187, %v1379
  %v1381 = vpop.f32.mrf.mxu0
  %v1382 = vadd.f32 %v1189, %v1381
  %v1383 = vpop.f32.mrf.mxu0
  %v1384 = vadd.f32 %v1191, %v1383
  %v1385 = vpop.f32.mrf.mxu0
  %v1386 = vadd.f32 %v1193, %v1385
  %1387 = vmatprep.mubr.bf16.mxu0 %v359
  %1388 = vmatmul.mubr.bf16.gmra.mxu0 %v358
  %v1389 = vpop.f32.mrf.mxu0
  %v1390 = vadd.f32 %v1197, %v1389
  %v1391 = vpop.f32.mrf.mxu0
  %v1392 = vadd.f32 %v1199, %v1391
  %v1393 = vpop.f32.mrf.mxu0
  %v1394 = vadd.f32 %v1201, %v1393
  %v1395 = vpop.f32.mrf.mxu0
  %v1396 = vadd.f32 %v1203, %v1395
  %1397 = vdwg.mxu0
  %1398 = vmatprep.subr.bf16.mxu0 %v846
  %1399 = vmatpush1.bf16.msra.mxu0 %v845
  %1400 = vmatprep.subr.bf16.mxu0 %v844
  %1401 = vmatpush1.bf16.msra.mxu0 %v843
  %1402 = vmatprep.subr.bf16.mxu0 %v842
  %1403 = vmatpush1.bf16.msra.mxu0 %v841
  %1404 = vmatprep.subr.bf16.mxu0 %v840
  %1405 = vmatpush1.bf16.msra.mxu0 %v839
  %1406 = vmatprep.subr.bf16.mxu0 %v838
  %1407 = vmatpush1.bf16.msra.mxu0 %v837
  %1408 = vmatprep.subr.bf16.mxu0 %v836
  %1409 = vmatpush1.bf16.msra.mxu0 %v835
  %1410 = vmatprep.subr.bf16.mxu0 %v834
  %1411 = vmatpush1.bf16.msra.mxu0 %v833
  %1412 = vmatprep.subr.bf16.mxu0 %v832
  %1413 = vmatpush1.bf16.msra.mxu0 %v831
  %1414 = vmatprep.subr.bf16.mxu0 %v862
  %1415 = vmatpush2.bf16.msra.mxu0 %v861
  %1416 = vmatprep.subr.bf16.mxu0 %v860
  %1417 = vmatpush2.bf16.msra.mxu0 %v859
  %1418 = vmatprep.subr.bf16.mxu0 %v858
  %1419 = vmatpush2.bf16.msra.mxu0 %v857
  %1420 = vmatprep.subr.bf16.mxu0 %v856
  %1421 = vmatpush2.bf16.msra.mxu0 %v855
  %1422 = vmatprep.subr.bf16.mxu0 %v854
  %1423 = vmatpush2.bf16.msra.mxu0 %v853
  %1424 = vmatprep.subr.bf16.mxu0 %v852
  %1425 = vmatpush2.bf16.msra.mxu0 %v851
  %1426 = vmatprep.subr.bf16.mxu0 %v850
  %1427 = vmatpush2.bf16.msra.mxu0 %v849
  %1428 = vmatprep.subr.bf16.mxu0 %v848
  %1429 = vmatpush2.bf16.msra.mxu0 %v847
  %1430 = vmatprep.mubr.bf16.mxu0 %v256
  %1431 = vmatmul.mubr.bf16.gmra.mxu0 %v255
  %v1432 = vpop.f32.mrf.mxu0
  %v1433 = vadd.f32 %v1240, %v1432
  %v1434 = vpop.f32.mrf.mxu0
  %v1435 = vadd.f32 %v1242, %v1434
  %v1436 = vpop.f32.mrf.mxu0
  %v1437 = vadd.f32 %v1244, %v1436
  %v1438 = vpop.f32.mrf.mxu0
  %v1439 = vadd.f32 %v1246, %v1438
  %1440 = vmatprep.mubr.bf16.mxu0 %v263
  %1441 = vmatmul.mubr.bf16.gmra.mxu0 %v262
  %v1442 = vpop.f32.mrf.mxu0
  %v1443 = vadd.f32 %v1250, %v1442
  %v1444 = vpop.f32.mrf.mxu0
  %v1445 = vadd.f32 %v1252, %v1444
  %v1446 = vpop.f32.mrf.mxu0
  %v1447 = vadd.f32 %v1254, %v1446
  %v1448 = vpop.f32.mrf.mxu0
  %v1449 = vadd.f32 %v1256, %v1448
  %1450 = vmatprep.mubr.bf16.mxu0 %v270
  %1451 = vmatmul.mubr.bf16.gmra.mxu0 %v269
  %v1452 = vpop.f32.mrf.mxu0
  %v1453 = vadd.f32 %v1260, %v1452
  %v1454 = vpop.f32.mrf.mxu0
  %v1455 = vadd.f32 %v1262, %v1454
  %v1456 = vpop.f32.mrf.mxu0
  %v1457 = vadd.f32 %v1264, %v1456
  %v1458 = vpop.f32.mrf.mxu0
  %v1459 = vadd.f32 %v1266, %v1458
  %1460 = vmatprep.mubr.bf16.mxu0 %v277
  %1461 = vmatmul.mubr.bf16.gmra.mxu0 %v276
  %v1462 = vpop.f32.mrf.mxu0
  %v1463 = vadd.f32 %v1270, %v1462
  %v1464 = vpop.f32.mrf.mxu0
  %v1465 = vadd.f32 %v1272, %v1464
  %v1466 = vpop.f32.mrf.mxu0
  %v1467 = vadd.f32 %v1274, %v1466
  %v1468 = vpop.f32.mrf.mxu0
  %v1469 = vadd.f32 %v1276, %v1468
  %1470 = vmatprep.mubr.bf16.mxu0 %v284
  %1471 = vmatmul.mubr.bf16.gmra.mxu0 %v283
  %v1472 = vpop.f32.mrf.mxu0
  %v1473 = vadd.f32 %v1280, %v1472
  %v1474 = vpop.f32.mrf.mxu0
  %v1475 = vadd.f32 %v1282, %v1474
  %v1476 = vpop.f32.mrf.mxu0
  %v1477 = vadd.f32 %v1284, %v1476
  %v1478 = vpop.f32.mrf.mxu0
  %v1479 = vadd.f32 %v1286, %v1478
  %1480 = vmatprep.mubr.bf16.mxu0 %v291
  %1481 = vmatmul.mubr.bf16.gmra.mxu0 %v290
  %v1482 = vpop.f32.mrf.mxu0
  %v1483 = vadd.f32 %v1290, %v1482
  %v1484 = vpop.f32.mrf.mxu0
  %v1485 = vadd.f32 %v1292, %v1484
  %v1486 = vpop.f32.mrf.mxu0
  %v1487 = vadd.f32 %v1294, %v1486
  %v1488 = vpop.f32.mrf.mxu0
  %v1489 = vadd.f32 %v1296, %v1488
  %1490 = vmatprep.mubr.bf16.mxu0 %v298
  %1491 = vmatmul.mubr.bf16.gmra.mxu0 %v297
  %v1492 = vpop.f32.mrf.mxu0
  %v1493 = vadd.f32 %v1300, %v1492
  %v1494 = vpop.f32.mrf.mxu0
  %v1495 = vadd.f32 %v1302, %v1494
  %v1496 = vpop.f32.mrf.mxu0
  %v1497 = vadd.f32 %v1304, %v1496
  %v1498 = vpop.f32.mrf.mxu0
  %v1499 = vadd.f32 %v1306, %v1498
  %1500 = vmatprep.mubr.bf16.mxu0 %v305
  %1501 = vmatmul.mubr.bf16.gmra.mxu0 %v304
  %v1502 = vpop.f32.mrf.mxu0
  %v1503 = vadd.f32 %v1310, %v1502
  %v1504 = vpop.f32.mrf.mxu0
  %v1505 = vadd.f32 %v1312, %v1504
  %v1506 = vpop.f32.mrf.mxu0
  %v1507 = vadd.f32 %v1314, %v1506
  %v1508 = vpop.f32.mrf.mxu0
  %v1509 = vadd.f32 %v1316, %v1508
  %1510 = vmatprep.mubr.bf16.mxu0 %v312
  %1511 = vmatmul.mubr.bf16.gmra.mxu0 %v311
  %v1512 = vpop.f32.mrf.mxu0
  %v1513 = vadd.f32 %v1320, %v1512
  %v1514 = vpop.f32.mrf.mxu0
  %v1515 = vadd.f32 %v1322, %v1514
  %v1516 = vpop.f32.mrf.mxu0
  %v1517 = vadd.f32 %v1324, %v1516
  %v1518 = vpop.f32.mrf.mxu0
  %v1519 = vadd.f32 %v1326, %v1518
  %1520 = vmatprep.mubr.bf16.mxu0 %v319
  %1521 = vmatmul.mubr.bf16.gmra.mxu0 %v318
  %v1522 = vpop.f32.mrf.mxu0
  %v1523 = vadd.f32 %v1330, %v1522
  %v1524 = vpop.f32.mrf.mxu0
  %v1525 = vadd.f32 %v1332, %v1524
  %v1526 = vpop.f32.mrf.mxu0
  %v1527 = vadd.f32 %v1334, %v1526
  %v1528 = vpop.f32.mrf.mxu0
  %v1529 = vadd.f32 %v1336, %v1528
  %1530 = vmatprep.mubr.bf16.mxu0 %v326
  %1531 = vmatmul.mubr.bf16.gmra.mxu0 %v325
  %v1532 = vpop.f32.mrf.mxu0
  %v1533 = vadd.f32 %v1340, %v1532
  %v1534 = vpop.f32.mrf.mxu0
  %v1535 = vadd.f32 %v1342, %v1534
  %v1536 = vpop.f32.mrf.mxu0
  %v1537 = vadd.f32 %v1344, %v1536
  %v1538 = vpop.f32.mrf.mxu0
  %v1539 = vadd.f32 %v1346, %v1538
  %1540 = vmatprep.mubr.bf16.mxu0 %v333
  %1541 = vmatmul.mubr.bf16.gmra.mxu0 %v332
  %v1542 = vpop.f32.mrf.mxu0
  %v1543 = vadd.f32 %v1350, %v1542
  %v1544 = vpop.f32.mrf.mxu0
  %v1545 = vadd.f32 %v1352, %v1544
  %v1546 = vpop.f32.mrf.mxu0
  %v1547 = vadd.f32 %v1354, %v1546
  %v1548 = vpop.f32.mrf.mxu0
  %v1549 = vadd.f32 %v1356, %v1548
  %1550 = vmatprep.mubr.bf16.mxu0 %v340
  %1551 = vmatmul.mubr.bf16.gmra.mxu0 %v339
  %v1552 = vpop.f32.mrf.mxu0
  %v1553 = vadd.f32 %v1360, %v1552
  %v1554 = vpop.f32.mrf.mxu0
  %v1555 = vadd.f32 %v1362, %v1554
  %v1556 = vpop.f32.mrf.mxu0
  %v1557 = vadd.f32 %v1364, %v1556
  %v1558 = vpop.f32.mrf.mxu0
  %v1559 = vadd.f32 %v1366, %v1558
  %1560 = vmatprep.mubr.bf16.mxu0 %v347
  %1561 = vmatmul.mubr.bf16.gmra.mxu0 %v346
  %v1562 = vpop.f32.mrf.mxu0
  %v1563 = vadd.f32 %v1370, %v1562
  %v1564 = vpop.f32.mrf.mxu0
  %v1565 = vadd.f32 %v1372, %v1564
  %v1566 = vpop.f32.mrf.mxu0
  %v1567 = vadd.f32 %v1374, %v1566
  %v1568 = vpop.f32.mrf.mxu0
  %v1569 = vadd.f32 %v1376, %v1568
  %1570 = vmatprep.mubr.bf16.mxu0 %v354
  %1571 = vmatmul.mubr.bf16.gmra.mxu0 %v353
  %v1572 = vpop.f32.mrf.mxu0
  %v1573 = vadd.f32 %v1380, %v1572
  %v1574 = vpop.f32.mrf.mxu0
  %v1575 = vadd.f32 %v1382, %v1574
  %v1576 = vpop.f32.mrf.mxu0
  %v1577 = vadd.f32 %v1384, %v1576
  %v1578 = vpop.f32.mrf.mxu0
  %v1579 = vadd.f32 %v1386, %v1578
  %1580 = vmatprep.mubr.bf16.mxu0 %v361
  %1581 = vmatmul.mubr.bf16.gmra.mxu0 %v360
  %v1582 = vpop.f32.mrf.mxu0
  %v1583 = vadd.f32 %v1390, %v1582
  %v1584 = vpop.f32.mrf.mxu0
  %v1585 = vadd.f32 %v1392, %v1584
  %v1586 = vpop.f32.mrf.mxu0
  %v1587 = vadd.f32 %v1394, %v1586
  %v1588 = vpop.f32.mrf.mxu0
  %v1589 = vadd.f32 %v1396, %v1588
  %1590 = vdwg.mxu0
  %1591 = vmatprep.subr.bf16.mxu0 0
  %1592 = vmatpush1.bf16.msra.mxu0 0
  %1593 = vmatprep.subr.bf16.mxu0 0
  %1594 = vmatpush1.bf16.msra.mxu0 0
  %1595 = vmatprep.subr.bf16.mxu0 0
  %1596 = vmatpush1.bf16.msra.mxu0 0
  %1597 = vmatprep.subr.bf16.mxu0 0
  %1598 = vmatpush1.bf16.msra.mxu0 0
  %1599 = vmatprep.subr.bf16.mxu0 0
  %1600 = vmatpush1.bf16.msra.mxu0 0
  %1601 = vmatprep.subr.bf16.mxu0 0
  %1602 = vmatpush1.bf16.msra.mxu0 0
  %1603 = vmatprep.subr.bf16.mxu0 0
  %1604 = vmatpush1.bf16.msra.mxu0 0
  %1605 = vmatprep.subr.bf16.mxu0 %v864
  %1606 = vmatpush1.bf16.msra.mxu0 %v863
  %1607 = vmatprep.subr.bf16.mxu0 0
  %1608 = vmatpush2.bf16.msra.mxu0 0
  %1609 = vmatprep.subr.bf16.mxu0 0
  %1610 = vmatpush2.bf16.msra.mxu0 0
  %1611 = vmatprep.subr.bf16.mxu0 0
  %1612 = vmatpush2.bf16.msra.mxu0 0
  %1613 = vmatprep.subr.bf16.mxu0 0
  %1614 = vmatpush2.bf16.msra.mxu0 0
  %1615 = vmatprep.subr.bf16.mxu0 0
  %1616 = vmatpush2.bf16.msra.mxu0 0
  %1617 = vmatprep.subr.bf16.mxu0 0
  %1618 = vmatpush2.bf16.msra.mxu0 0
  %1619 = vmatprep.subr.bf16.mxu0 0
  %1620 = vmatpush2.bf16.msra.mxu0 0
  %1621 = vmatprep.subr.bf16.mxu0 0
  %1622 = vmatpush2.bf16.msra.mxu0 0
  %1623 = vmatprep.mubr.bf16.mxu0 0
  %1624 = vmatmul.mubr.bf16.gmra.mxu0 %v965
  %v1625 = vpop.f32.mrf.mxu0
  %v1626 = vadd.f32 %v1433, %v1625
  %v1627 = vpop.f32.mrf.mxu0
  %v1628 = vadd.f32 %v1435, %v1627
  %v1629 = vpop.f32.mrf.mxu0
  %v1630 = vadd.f32 %v1437, %v1629
  %v1631 = vpop.f32.mrf.mxu0
  %v1632 = vadd.f32 %v1439, %v1631
  %1633 = vmatprep.mubr.bf16.mxu0 0
  %1634 = vmatmul.mubr.bf16.gmra.mxu0 %v968
  %v1635 = vpop.f32.mrf.mxu0
  %v1636 = vadd.f32 %v1443, %v1635
  %v1637 = vpop.f32.mrf.mxu0
  %v1638 = vadd.f32 %v1445, %v1637
  %v1639 = vpop.f32.mrf.mxu0
  %v1640 = vadd.f32 %v1447, %v1639
  %v1641 = vpop.f32.mrf.mxu0
  %v1642 = vadd.f32 %v1449, %v1641
  %1643 = vmatprep.mubr.bf16.mxu0 0
  %1644 = vmatmul.mubr.bf16.gmra.mxu0 %v971
  %v1645 = vpop.f32.mrf.mxu0
  %v1646 = vadd.f32 %v1453, %v1645
  %v1647 = vpop.f32.mrf.mxu0
  %v1648 = vadd.f32 %v1455, %v1647
  %v1649 = vpop.f32.mrf.mxu0
  %v1650 = vadd.f32 %v1457, %v1649
  %v1651 = vpop.f32.mrf.mxu0
  %v1652 = vadd.f32 %v1459, %v1651
  %1653 = vmatprep.mubr.bf16.mxu0 0
  %1654 = vmatmul.mubr.bf16.gmra.mxu0 %v974
  %v1655 = vpop.f32.mrf.mxu0
  %v1656 = vadd.f32 %v1463, %v1655
  %v1657 = vpop.f32.mrf.mxu0
  %v1658 = vadd.f32 %v1465, %v1657
  %v1659 = vpop.f32.mrf.mxu0
  %v1660 = vadd.f32 %v1467, %v1659
  %v1661 = vpop.f32.mrf.mxu0
  %v1662 = vadd.f32 %v1469, %v1661
  %1663 = vmatprep.mubr.bf16.mxu0 0
  %1664 = vmatmul.mubr.bf16.gmra.mxu0 %v977
  %v1665 = vpop.f32.mrf.mxu0
  %v1666 = vadd.f32 %v1473, %v1665
  %v1667 = vpop.f32.mrf.mxu0
  %v1668 = vadd.f32 %v1475, %v1667
  %v1669 = vpop.f32.mrf.mxu0
  %v1670 = vadd.f32 %v1477, %v1669
  %v1671 = vpop.f32.mrf.mxu0
  %v1672 = vadd.f32 %v1479, %v1671
  %1673 = vmatprep.mubr.bf16.mxu0 0
  %1674 = vmatmul.mubr.bf16.gmra.mxu0 %v980
  %v1675 = vpop.f32.mrf.mxu0
  %v1676 = vadd.f32 %v1483, %v1675
  %v1677 = vpop.f32.mrf.mxu0
  %v1678 = vadd.f32 %v1485, %v1677
  %v1679 = vpop.f32.mrf.mxu0
  %v1680 = vadd.f32 %v1487, %v1679
  %v1681 = vpop.f32.mrf.mxu0
  %v1682 = vadd.f32 %v1489, %v1681
  %1683 = vmatprep.mubr.bf16.mxu0 0
  %1684 = vmatmul.mubr.bf16.gmra.mxu0 %v983
  %v1685 = vpop.f32.mrf.mxu0
  %v1686 = vadd.f32 %v1493, %v1685
  %v1687 = vpop.f32.mrf.mxu0
  %v1688 = vadd.f32 %v1495, %v1687
  %v1689 = vpop.f32.mrf.mxu0
  %v1690 = vadd.f32 %v1497, %v1689
  %v1691 = vpop.f32.mrf.mxu0
  %v1692 = vadd.f32 %v1499, %v1691
  %1693 = vmatprep.mubr.bf16.mxu0 0
  %1694 = vmatmul.mubr.bf16.gmra.mxu0 %v986
  %v1695 = vpop.f32.mrf.mxu0
  %v1696 = vadd.f32 %v1503, %v1695
  %v1697 = vpop.f32.mrf.mxu0
  %v1698 = vadd.f32 %v1505, %v1697
  %v1699 = vpop.f32.mrf.mxu0
  %v1700 = vadd.f32 %v1507, %v1699
  %v1701 = vpop.f32.mrf.mxu0
  %v1702 = vadd.f32 %v1509, %v1701
  %1703 = vmatprep.mubr.bf16.mxu0 0
  %1704 = vmatmul.mubr.bf16.gmra.mxu0 %v989
  %v1705 = vpop.f32.mrf.mxu0
  %v1706 = vadd.f32 %v1513, %v1705
  %v1707 = vpop.f32.mrf.mxu0
  %v1708 = vadd.f32 %v1515, %v1707
  %v1709 = vpop.f32.mrf.mxu0
  %v1710 = vadd.f32 %v1517, %v1709
  %v1711 = vpop.f32.mrf.mxu0
  %v1712 = vadd.f32 %v1519, %v1711
  %1713 = vmatprep.mubr.bf16.mxu0 0
  %1714 = vmatmul.mubr.bf16.gmra.mxu0 %v992
  %v1715 = vpop.f32.mrf.mxu0
  %v1716 = vadd.f32 %v1523, %v1715
  %v1717 = vpop.f32.mrf.mxu0
  %v1718 = vadd.f32 %v1525, %v1717
  %v1719 = vpop.f32.mrf.mxu0
  %v1720 = vadd.f32 %v1527, %v1719
  %v1721 = vpop.f32.mrf.mxu0
  %v1722 = vadd.f32 %v1529, %v1721
  %1723 = vmatprep.mubr.bf16.mxu0 0
  %1724 = vmatmul.mubr.bf16.gmra.mxu0 %v995
  %v1725 = vpop.f32.mrf.mxu0
  %v1726 = vadd.f32 %v1533, %v1725
  %v1727 = vpop.f32.mrf.mxu0
  %v1728 = vadd.f32 %v1535, %v1727
  %v1729 = vpop.f32.mrf.mxu0
  %v1730 = vadd.f32 %v1537, %v1729
  %v1731 = vpop.f32.mrf.mxu0
  %v1732 = vadd.f32 %v1539, %v1731
  %1733 = vmatprep.mubr.bf16.mxu0 0
  %1734 = vmatmul.mubr.bf16.gmra.mxu0 %v998
  %v1735 = vpop.f32.mrf.mxu0
  %v1736 = vadd.f32 %v1543, %v1735
  %v1737 = vpop.f32.mrf.mxu0
  %v1738 = vadd.f32 %v1545, %v1737
  %v1739 = vpop.f32.mrf.mxu0
  %v1740 = vadd.f32 %v1547, %v1739
  %v1741 = vpop.f32.mrf.mxu0
  %v1742 = vadd.f32 %v1549, %v1741
  %1743 = vmatprep.mubr.bf16.mxu0 0
  %1744 = vmatmul.mubr.bf16.gmra.mxu0 %v1001
  %v1745 = vpop.f32.mrf.mxu0
  %v1746 = vadd.f32 %v1553, %v1745
  %v1747 = vpop.f32.mrf.mxu0
  %v1748 = vadd.f32 %v1555, %v1747
  %v1749 = vpop.f32.mrf.mxu0
  %v1750 = vadd.f32 %v1557, %v1749
  %v1751 = vpop.f32.mrf.mxu0
  %v1752 = vadd.f32 %v1559, %v1751
  %1753 = vmatprep.mubr.bf16.mxu0 0
  %1754 = vmatmul.mubr.bf16.gmra.mxu0 %v1004
  %v1755 = vpop.f32.mrf.mxu0
  %v1756 = vadd.f32 %v1563, %v1755
  %v1757 = vpop.f32.mrf.mxu0
  %v1758 = vadd.f32 %v1565, %v1757
  %v1759 = vpop.f32.mrf.mxu0
  %v1760 = vadd.f32 %v1567, %v1759
  %v1761 = vpop.f32.mrf.mxu0
  %v1762 = vadd.f32 %v1569, %v1761
  %1763 = vmatprep.mubr.bf16.mxu0 0
  %1764 = vmatmul.mubr.bf16.gmra.mxu0 %v1007
  %v1765 = vpop.f32.mrf.mxu0
  %v1766 = vadd.f32 %v1573, %v1765
  %v1767 = vpop.f32.mrf.mxu0
  %v1768 = vadd.f32 %v1575, %v1767
  %v1769 = vpop.f32.mrf.mxu0
  %v1770 = vadd.f32 %v1577, %v1769
  %v1771 = vpop.f32.mrf.mxu0
  %v1772 = vadd.f32 %v1579, %v1771
  %1773 = vmatprep.mubr.bf16.mxu0 0
  %1774 = vmatmul.mubr.bf16.gmra.mxu0 %v1010
  %v1775 = vpop.f32.mrf.mxu0
  %v1776 = vadd.f32 %v1583, %v1775
  %v1777 = vpop.f32.mrf.mxu0
  %v1778 = vadd.f32 %v1585, %v1777
  %v1779 = vpop.f32.mrf.mxu0
  %v1780 = vadd.f32 %v1587, %v1779
  %v1781 = vpop.f32.mrf.mxu0
  %v1782 = vadd.f32 %v1589, %v1781
  %1783 = vdwg.mxu0
  %v1784 = vmax.f32 %v1626, 0.0
  %v1785 = vmax.f32 %v1628, 0.0
  %v1786 = vmax.f32 %v1630, 0.0
  %v1787 = vmax.f32 %v1632, 0.0
  %v1788 = vmax.f32 %v1636, 0.0
  %v1789 = vmax.f32 %v1638, 0.0
  %v1790 = vmax.f32 %v1640, 0.0
  %v1791 = vmax.f32 %v1642, 0.0
  %v1792 = vmax.f32 %v1646, 0.0
  %v1793 = vmax.f32 %v1648, 0.0
  %v1794 = vmax.f32 %v1650, 0.0
  %v1795 = vmax.f32 %v1652, 0.0
  %v1796 = vmax.f32 %v1656, 0.0
  %v1797 = vmax.f32 %v1658, 0.0
  %v1798 = vmax.f32 %v1660, 0.0
  %v1799 = vmax.f32 %v1662, 0.0
  %v1800 = vmax.f32 %v1666, 0.0
  %v1801 = vmax.f32 %v1668, 0.0
  %v1802 = vmax.f32 %v1670, 0.0
  %v1803 = vmax.f32 %v1672, 0.0
  %v1804 = vmax.f32 %v1676, 0.0
  %v1805 = vmax.f32 %v1678, 0.0
  %v1806 = vmax.f32 %v1680, 0.0
  %v1807 = vmax.f32 %v1682, 0.0
  %v1808 = vmax.f32 %v1686, 0.0
  %v1809 = vmax.f32 %v1688, 0.0
  %v1810 = vmax.f32 %v1690, 0.0
  %v1811 = vmax.f32 %v1692, 0.0
  %v1812 = vmax.f32 %v1696, 0.0
  %v1813 = vmax.f32 %v1698, 0.0
  %v1814 = vmax.f32 %v1700, 0.0
  %v1815 = vmax.f32 %v1702, 0.0
  %v1816 = vmax.f32 %v1706, 0.0
  %v1817 = vmax.f32 %v1708, 0.0
  %v1818 = vmax.f32 %v1710, 0.0
  %v1819 = vmax.f32 %v1712, 0.0
  %v1820 = vmax.f32 %v1716, 0.0
  %v1821 = vmax.f32 %v1718, 0.0
  %v1822 = vmax.f32 %v1720, 0.0
  %v1823 = vmax.f32 %v1722, 0.0
  %v1824 = vmax.f32 %v1726, 0.0
  %v1825 = vmax.f32 %v1728, 0.0
  %v1826 = vmax.f32 %v1730, 0.0
  %v1827 = vmax.f32 %v1732, 0.0
  %v1828 = vmax.f32 %v1736, 0.0
  %v1829 = vmax.f32 %v1738, 0.0
  %v1830 = vmax.f32 %v1740, 0.0
  %v1831 = vmax.f32 %v1742, 0.0
  %v1832 = vmax.f32 %v1746, 0.0
  %v1833 = vmax.f32 %v1748, 0.0
  %v1834 = vmax.f32 %v1750, 0.0
  %v1835 = vmax.f32 %v1752, 0.0
  %v1836 = vmax.f32 %v1756, 0.0
  %v1837 = vmax.f32 %v1758, 0.0
  %v1838 = vmax.f32 %v1760, 0.0
  %v1839 = vmax.f32 %v1762, 0.0
  %v1840 = vmax.f32 %v1766, 0.0
  %v1841 = vmax.f32 %v1768, 0.0
  %v1842 = vmax.f32 %v1770, 0.0
  %v1843 = vmax.f32 %v1772, 0.0
  %v1844 = vmax.f32 %v1776, 0.0
  %v1845 = vmax.f32 %v1778, 0.0
  %v1846 = vmax.f32 %v1780, 0.0
  %v1847 = vmax.f32 %v1782, 0.0
  %v1848 = vpack.c.bf16 %v1786, %v1784
  %v1849 = vpack.c.bf16 %v1787, %v1785
  %v1850 = vpack.c.bf16 %v1790, %v1788
  %v1851 = vpack.c.bf16 %v1791, %v1789
  %v1852 = vpack.c.bf16 %v1794, %v1792
  %v1853 = vpack.c.bf16 %v1795, %v1793
  %v1854 = vpack.c.bf16 %v1798, %v1796
  %v1855 = vpack.c.bf16 %v1799, %v1797
  %v1856 = vpack.c.bf16 %v1802, %v1800
  %v1857 = vpack.c.bf16 %v1803, %v1801
  %v1858 = vpack.c.bf16 %v1806, %v1804
  %v1859 = vpack.c.bf16 %v1807, %v1805
  %v1860 = vpack.c.bf16 %v1810, %v1808
  %v1861 = vpack.c.bf16 %v1811, %v1809
  %v1862 = vpack.c.bf16 %v1814, %v1812
  %v1863 = vpack.c.bf16 %v1815, %v1813
  %v1864 = vpack.c.bf16 %v1818, %v1816
  %v1865 = vpack.c.bf16 %v1819, %v1817
  %v1866 = vpack.c.bf16 %v1822, %v1820
  %v1867 = vpack.c.bf16 %v1823, %v1821
  %v1868 = vpack.c.bf16 %v1826, %v1824
  %v1869 = vpack.c.bf16 %v1827, %v1825
  %v1870 = vpack.c.bf16 %v1830, %v1828
  %v1871 = vpack.c.bf16 %v1831, %v1829
  %v1872 = vpack.c.bf16 %v1834, %v1832
  %v1873 = vpack.c.bf16 %v1835, %v1833
  %v1874 = vpack.c.bf16 %v1838, %v1836
  %v1875 = vpack.c.bf16 %v1839, %v1837
  %v1876 = vpack.c.bf16 %v1842, %v1840
  %v1877 = vpack.c.bf16 %v1843, %v1841
  %v1878 = vpack.c.bf16 %v1846, %v1844
  %v1879 = vpack.c.bf16 %v1847, %v1845
  %v1880 = vld [vmem:[%s3] sm:$0xff]
  %v1881 = vld [vmem:[%s3 + $0x8] sm:$0xff]
  %v1882 = vld [vmem:[%s3 + $0x10] sm:$0xff]
  %v1883 = vld [vmem:[%s3 + $0x18] sm:$0xff]
  %v1884 = vld [vmem:[%s3 + $0x20] sm:$0xff]
  %v1885 = vld [vmem:[%s3 + $0x28] sm:$0xff]
  %v1886 = vld [vmem:[%s3 + $0x30] sm:$0xff]
  %v1887 = vld [vmem:[%s3 + $0x38] sm:$0xff]
  %v1888 = vld [vmem:[%s3 + $0x40] sm:$0xff]
  %v1889 = vld [vmem:[%s3 + $0x48] sm:$0xff]
  %v1890 = vld [vmem:[%s3 + $0x50] sm:$0xff]
  %v1891 = vld [vmem:[%s3 + $0x58] sm:$0xff]
  %v1892 = vld [vmem:[%s3 + $0x60] sm:$0xff]
  %v1893 = vld [vmem:[%s3 + $0x68] sm:$0xff]
  %v1894 = vld [vmem:[%s3 + $0x70] sm:$0xff]
  %v1895 = vld [vmem:[%s3 + $0x78] sm:$0xff]
  %v1896 = vld [vmem:[%s3 + $0x80] sm:$0xff]
  %v1897 = vld [vmem:[%s3 + $0x88] sm:$0xff]
  %v1898 = vld [vmem:[%s3 + $0x90] sm:$0xff]
  %v1899 = vld [vmem:[%s3 + $0x98] sm:$0xff]
  %v1900 = vld [vmem:[%s3 + $0xa0] sm:$0xff]
  %v1901 = vld [vmem:[%s3 + $0xa8] sm:$0xff]
  %v1902 = vld [vmem:[%s3 + $0xb0] sm:$0xff]
  %v1903 = vld [vmem:[%s3 + $0xb8] sm:$0xff]
  %v1904 = vld [vmem:[%s3 + $0xc0] sm:$0xff]
  %v1905 = vld [vmem:[%s3 + $0xc8] sm:$0xff]
  %v1906 = vld [vmem:[%s3 + $0xd0] sm:$0xff]
  %v1907 = vld [vmem:[%s3 + $0xd8] sm:$0xff]
  %v1908 = vld [vmem:[%s3 + $0xe0] sm:$0xff]
  %v1909 = vld [vmem:[%s3 + $0xe8] sm:$0xff]
  %v1910 = vld [vmem:[%s3 + $0xf0] sm:$0xff]
  %v1911 = vld [vmem:[%s3 + $0xf8] sm:$0xff]
  %v1912 = vld [vmem:[%s4] sm:$0x3]
  %v1914 = vlaneseq
  %v1915 = vshrl.u32 %v1914, 7
  %v1916 = vsub.s32 0, %v1915
  %v1917 = vrot.slane %v1912, %v1916
  %v1918 = vlaneseq
  %v1919 = vshrl.u32 %v1918, 7
  %v1920 = vsub.s32 1, %v1919
  %v1921 = vrot.slane %v1912, %v1920
  %v1956 = vunpack.c.l.b16 %v1880
  %v1957 = vunpack.c.h.b16 %v1880
  %v1958 = vunpack.c.l.b16 %v1881
  %v1959 = vunpack.c.h.b16 %v1881
  %v1960 = vunpack.c.l.b16 %v1882
  %v1961 = vunpack.c.h.b16 %v1882
  %v1962 = vunpack.c.l.b16 %v1883
  %v1963 = vunpack.c.h.b16 %v1883
  %v1964 = vunpack.c.l.b16 %v1884
  %v1965 = vunpack.c.h.b16 %v1884
  %v1966 = vunpack.c.l.b16 %v1885
  %v1967 = vunpack.c.h.b16 %v1885
  %v1968 = vunpack.c.l.b16 %v1886
  %v1969 = vunpack.c.h.b16 %v1886
  %v1970 = vunpack.c.l.b16 %v1887
  %v1971 = vunpack.c.h.b16 %v1887
  %v1972 = vunpack.c.l.b16 %v1888
  %v1973 = vunpack.c.h.b16 %v1888
  %v1974 = vunpack.c.l.b16 %v1889
  %v1975 = vunpack.c.h.b16 %v1889
  %v1976 = vunpack.c.l.b16 %v1890
  %v1977 = vunpack.c.h.b16 %v1890
  %v1978 = vunpack.c.l.b16 %v1891
  %v1979 = vunpack.c.h.b16 %v1891
  %v1980 = vunpack.c.l.b16 %v1892
  %v1981 = vunpack.c.h.b16 %v1892
  %v1982 = vunpack.c.l.b16 %v1893
  %v1983 = vunpack.c.h.b16 %v1893
  %v1984 = vunpack.c.l.b16 %v1894
  %v1985 = vunpack.c.h.b16 %v1894
  %v1986 = vunpack.c.l.b16 %v1895
  %v1987 = vunpack.c.h.b16 %v1895
  %v1988 = vunpack.c.l.b16 %v1896
  %v1989 = vunpack.c.h.b16 %v1896
  %v1990 = vunpack.c.l.b16 %v1897
  %v1991 = vunpack.c.h.b16 %v1897
  %v1992 = vunpack.c.l.b16 %v1898
  %v1993 = vunpack.c.h.b16 %v1898
  %v1994 = vunpack.c.l.b16 %v1899
  %v1995 = vunpack.c.h.b16 %v1899
  %v1996 = vunpack.c.l.b16 %v1900
  %v1997 = vunpack.c.h.b16 %v1900
  %v1998 = vunpack.c.l.b16 %v1901
  %v1999 = vunpack.c.h.b16 %v1901
  %v2000 = vunpack.c.l.b16 %v1902
  %v2001 = vunpack.c.h.b16 %v1902
  %v2002 = vunpack.c.l.b16 %v1903
  %v2003 = vunpack.c.h.b16 %v1903
  %v2004 = vunpack.c.l.b16 %v1904
  %v2005 = vunpack.c.h.b16 %v1904
  %v2006 = vunpack.c.l.b16 %v1905
  %v2007 = vunpack.c.h.b16 %v1905
  %v2008 = vunpack.c.l.b16 %v1906
  %v2009 = vunpack.c.h.b16 %v1906
  %v2010 = vunpack.c.l.b16 %v1907
  %v2011 = vunpack.c.h.b16 %v1907
  %v2012 = vunpack.c.l.b16 %v1908
  %v2013 = vunpack.c.h.b16 %v1908
  %v2014 = vunpack.c.l.b16 %v1909
  %v2015 = vunpack.c.h.b16 %v1909
  %v2016 = vunpack.c.l.b16 %v1910
  %v2017 = vunpack.c.h.b16 %v1910
  %v2018 = vunpack.c.l.b16 %v1911
  %v2019 = vunpack.c.h.b16 %v1911
  %v2020 = vpack.c.b16 %v1958, %v1956
  %v2021 = vpack.c.b16 %v1959, %v1957
  %v2022 = vpack.c.b16 %v1962, %v1960
  %v2023 = vpack.c.b16 %v1963, %v1961
  %v2024 = vpack.c.b16 %v1966, %v1964
  %v2025 = vpack.c.b16 %v1967, %v1965
  %v2026 = vpack.c.b16 %v1970, %v1968
  %v2027 = vpack.c.b16 %v1971, %v1969
  %v2028 = vpack.c.b16 %v1974, %v1972
  %v2029 = vpack.c.b16 %v1975, %v1973
  %v2030 = vpack.c.b16 %v1978, %v1976
  %v2031 = vpack.c.b16 %v1979, %v1977
  %v2032 = vpack.c.b16 %v1982, %v1980
  %v2033 = vpack.c.b16 %v1983, %v1981
  %v2034 = vpack.c.b16 %v1986, %v1984
  %v2035 = vpack.c.b16 %v1987, %v1985
  %v2036 = vpack.c.b16 %v1990, %v1988
  %v2037 = vpack.c.b16 %v1991, %v1989
  %v2038 = vpack.c.b16 %v1994, %v1992
  %v2039 = vpack.c.b16 %v1995, %v1993
  %v2040 = vpack.c.b16 %v1998, %v1996
  %v2041 = vpack.c.b16 %v1999, %v1997
  %v2042 = vpack.c.b16 %v2002, %v2000
  %v2043 = vpack.c.b16 %v2003, %v2001
  %v2044 = vpack.c.b16 %v2006, %v2004
  %v2045 = vpack.c.b16 %v2007, %v2005
  %v2046 = vpack.c.b16 %v2010, %v2008
  %v2047 = vpack.c.b16 %v2011, %v2009
  %v2048 = vpack.c.b16 %v2014, %v2012
  %v2049 = vpack.c.b16 %v2015, %v2013
  %v2050 = vpack.c.b16 %v2018, %v2016
  %v2051 = vpack.c.b16 %v2019, %v2017
  %2084 = vmatprep.subr.bf16.mxu0 %v2035
  %2085 = vmatpush1.bf16.msra.mxu0 %v2034
  %2086 = vmatprep.subr.bf16.mxu0 %v2033
  %2087 = vmatpush1.bf16.msra.mxu0 %v2032
  %2088 = vmatprep.subr.bf16.mxu0 %v2031
  %2089 = vmatpush1.bf16.msra.mxu0 %v2030
  %2090 = vmatprep.subr.bf16.mxu0 %v2029
  %2091 = vmatpush1.bf16.msra.mxu0 %v2028
  %2092 = vmatprep.subr.bf16.mxu0 %v2027
  %2093 = vmatpush1.bf16.msra.mxu0 %v2026
  %2094 = vmatprep.subr.bf16.mxu0 %v2025
  %2095 = vmatpush1.bf16.msra.mxu0 %v2024
  %2096 = vmatprep.subr.bf16.mxu0 %v2023
  %2097 = vmatpush1.bf16.msra.mxu0 %v2022
  %2098 = vmatprep.subr.bf16.mxu0 %v2021
  %2099 = vmatpush1.bf16.msra.mxu0 %v2020
  %2100 = vmatprep.subr.bf16.mxu0 %v2051
  %2101 = vmatpush2.bf16.msra.mxu0 %v2050
  %2102 = vmatprep.subr.bf16.mxu0 %v2049
  %2103 = vmatpush2.bf16.msra.mxu0 %v2048
  %2104 = vmatprep.subr.bf16.mxu0 %v2047
  %2105 = vmatpush2.bf16.msra.mxu0 %v2046
  %2106 = vmatprep.subr.bf16.mxu0 %v2045
  %2107 = vmatpush2.bf16.msra.mxu0 %v2044
  %2108 = vmatprep.subr.bf16.mxu0 %v2043
  %2109 = vmatpush2.bf16.msra.mxu0 %v2042
  %2110 = vmatprep.subr.bf16.mxu0 %v2041
  %2111 = vmatpush2.bf16.msra.mxu0 %v2040
  %2112 = vmatprep.subr.bf16.mxu0 %v2039
  %2113 = vmatpush2.bf16.msra.mxu0 %v2038
  %2114 = vmatprep.subr.bf16.mxu0 %v2037
  %2115 = vmatpush2.bf16.msra.mxu0 %v2036
  %2116 = vmatprep.mubr.bf16.mxu0 %v1849
  %2117 = vmatmul.mubr.bf16.gmra.mxu0 %v1848
  %v2118 = vpop.f32.mrf.mxu0
  %v2119 = vadd.f32 %v1917, %v2118
  %v2120 = vpop.f32.mrf.mxu0
  %v2121 = vadd.f32 %v1921, %v2120
  %v2122 = vpop.f32.mrf.mxu0
  %v2123 = vadd.f32 %v1917, %v2122
  %v2124 = vpop.f32.mrf.mxu0
  %v2125 = vadd.f32 %v1921, %v2124
  %2126 = vmatprep.mubr.bf16.mxu0 %v1851
  %2127 = vmatmul.mubr.bf16.gmra.mxu0 %v1850
  %v2128 = vpop.f32.mrf.mxu0
  %v2129 = vadd.f32 %v1917, %v2128
  %v2130 = vpop.f32.mrf.mxu0
  %v2131 = vadd.f32 %v1921, %v2130
  %v2132 = vpop.f32.mrf.mxu0
  %v2133 = vadd.f32 %v1917, %v2132
  %v2134 = vpop.f32.mrf.mxu0
  %v2135 = vadd.f32 %v1921, %v2134
  %2136 = vmatprep.mubr.bf16.mxu0 %v1853
  %2137 = vmatmul.mubr.bf16.gmra.mxu0 %v1852
  %v2138 = vpop.f32.mrf.mxu0
  %v2139 = vadd.f32 %v1917, %v2138
  %v2140 = vpop.f32.mrf.mxu0
  %v2141 = vadd.f32 %v1921, %v2140
  %v2142 = vpop.f32.mrf.mxu0
  %v2143 = vadd.f32 %v1917, %v2142
  %v2144 = vpop.f32.mrf.mxu0
  %v2145 = vadd.f32 %v1921, %v2144
  %2146 = vmatprep.mubr.bf16.mxu0 %v1855
  %2147 = vmatmul.mubr.bf16.gmra.mxu0 %v1854
  %v2148 = vpop.f32.mrf.mxu0
  %v2149 = vadd.f32 %v1917, %v2148
  %v2150 = vpop.f32.mrf.mxu0
  %v2151 = vadd.f32 %v1921, %v2150
  %v2152 = vpop.f32.mrf.mxu0
  %v2153 = vadd.f32 %v1917, %v2152
  %v2154 = vpop.f32.mrf.mxu0
  %v2155 = vadd.f32 %v1921, %v2154
  %2156 = vmatprep.mubr.bf16.mxu0 %v1857
  %2157 = vmatmul.mubr.bf16.gmra.mxu0 %v1856
  %v2158 = vpop.f32.mrf.mxu0
  %v2159 = vadd.f32 %v1917, %v2158
  %v2160 = vpop.f32.mrf.mxu0
  %v2161 = vadd.f32 %v1921, %v2160
  %v2162 = vpop.f32.mrf.mxu0
  %v2163 = vadd.f32 %v1917, %v2162
  %v2164 = vpop.f32.mrf.mxu0
  %v2165 = vadd.f32 %v1921, %v2164
  %2166 = vmatprep.mubr.bf16.mxu0 %v1859
  %2167 = vmatmul.mubr.bf16.gmra.mxu0 %v1858
  %v2168 = vpop.f32.mrf.mxu0
  %v2169 = vadd.f32 %v1917, %v2168
  %v2170 = vpop.f32.mrf.mxu0
  %v2171 = vadd.f32 %v1921, %v2170
  %v2172 = vpop.f32.mrf.mxu0
  %v2173 = vadd.f32 %v1917, %v2172
  %v2174 = vpop.f32.mrf.mxu0
  %v2175 = vadd.f32 %v1921, %v2174
  %2176 = vmatprep.mubr.bf16.mxu0 %v1861
  %2177 = vmatmul.mubr.bf16.gmra.mxu0 %v1860
  %v2178 = vpop.f32.mrf.mxu0
  %v2179 = vadd.f32 %v1917, %v2178
  %v2180 = vpop.f32.mrf.mxu0
  %v2181 = vadd.f32 %v1921, %v2180
  %v2182 = vpop.f32.mrf.mxu0
  %v2183 = vadd.f32 %v1917, %v2182
  %v2184 = vpop.f32.mrf.mxu0
  %v2185 = vadd.f32 %v1921, %v2184
  %2186 = vmatprep.mubr.bf16.mxu0 %v1863
  %2187 = vmatmul.mubr.bf16.gmra.mxu0 %v1862
  %v2188 = vpop.f32.mrf.mxu0
  %v2189 = vadd.f32 %v1917, %v2188
  %v2190 = vpop.f32.mrf.mxu0
  %v2191 = vadd.f32 %v1921, %v2190
  %v2192 = vpop.f32.mrf.mxu0
  %v2193 = vadd.f32 %v1917, %v2192
  %v2194 = vpop.f32.mrf.mxu0
  %v2195 = vadd.f32 %v1921, %v2194
  %2196 = vmatprep.mubr.bf16.mxu0 %v1865
  %2197 = vmatmul.mubr.bf16.gmra.mxu0 %v1864
  %v2198 = vpop.f32.mrf.mxu0
  %v2199 = vadd.f32 %v1917, %v2198
  %v2200 = vpop.f32.mrf.mxu0
  %v2201 = vadd.f32 %v1921, %v2200
  %v2202 = vpop.f32.mrf.mxu0
  %v2203 = vadd.f32 %v1917, %v2202
  %v2204 = vpop.f32.mrf.mxu0
  %v2205 = vadd.f32 %v1921, %v2204
  %2206 = vmatprep.mubr.bf16.mxu0 %v1867
  %2207 = vmatmul.mubr.bf16.gmra.mxu0 %v1866
  %v2208 = vpop.f32.mrf.mxu0
  %v2209 = vadd.f32 %v1917, %v2208
  %v2210 = vpop.f32.mrf.mxu0
  %v2211 = vadd.f32 %v1921, %v2210
  %v2212 = vpop.f32.mrf.mxu0
  %v2213 = vadd.f32 %v1917, %v2212
  %v2214 = vpop.f32.mrf.mxu0
  %v2215 = vadd.f32 %v1921, %v2214
  %2216 = vmatprep.mubr.bf16.mxu0 %v1869
  %2217 = vmatmul.mubr.bf16.gmra.mxu0 %v1868
  %v2218 = vpop.f32.mrf.mxu0
  %v2219 = vadd.f32 %v1917, %v2218
  %v2220 = vpop.f32.mrf.mxu0
  %v2221 = vadd.f32 %v1921, %v2220
  %v2222 = vpop.f32.mrf.mxu0
  %v2223 = vadd.f32 %v1917, %v2222
  %v2224 = vpop.f32.mrf.mxu0
  %v2225 = vadd.f32 %v1921, %v2224
  %2226 = vmatprep.mubr.bf16.mxu0 %v1871
  %2227 = vmatmul.mubr.bf16.gmra.mxu0 %v1870
  %v2228 = vpop.f32.mrf.mxu0
  %v2229 = vadd.f32 %v1917, %v2228
  %v2230 = vpop.f32.mrf.mxu0
  %v2231 = vadd.f32 %v1921, %v2230
  %v2232 = vpop.f32.mrf.mxu0
  %v2233 = vadd.f32 %v1917, %v2232
  %v2234 = vpop.f32.mrf.mxu0
  %v2235 = vadd.f32 %v1921, %v2234
  %2236 = vmatprep.mubr.bf16.mxu0 %v1873
  %2237 = vmatmul.mubr.bf16.gmra.mxu0 %v1872
  %v2238 = vpop.f32.mrf.mxu0
  %v2239 = vadd.f32 %v1917, %v2238
  %v2240 = vpop.f32.mrf.mxu0
  %v2241 = vadd.f32 %v1921, %v2240
  %v2242 = vpop.f32.mrf.mxu0
  %v2243 = vadd.f32 %v1917, %v2242
  %v2244 = vpop.f32.mrf.mxu0
  %v2245 = vadd.f32 %v1921, %v2244
  %2246 = vmatprep.mubr.bf16.mxu0 %v1875
  %2247 = vmatmul.mubr.bf16.gmra.mxu0 %v1874
  %v2248 = vpop.f32.mrf.mxu0
  %v2249 = vadd.f32 %v1917, %v2248
  %v2250 = vpop.f32.mrf.mxu0
  %v2251 = vadd.f32 %v1921, %v2250
  %v2252 = vpop.f32.mrf.mxu0
  %v2253 = vadd.f32 %v1917, %v2252
  %v2254 = vpop.f32.mrf.mxu0
  %v2255 = vadd.f32 %v1921, %v2254
  %2256 = vmatprep.mubr.bf16.mxu0 %v1877
  %2257 = vmatmul.mubr.bf16.gmra.mxu0 %v1876
  %v2258 = vpop.f32.mrf.mxu0
  %v2259 = vadd.f32 %v1917, %v2258
  %v2260 = vpop.f32.mrf.mxu0
  %v2261 = vadd.f32 %v1921, %v2260
  %v2262 = vpop.f32.mrf.mxu0
  %v2263 = vadd.f32 %v1917, %v2262
  %v2264 = vpop.f32.mrf.mxu0
  %v2265 = vadd.f32 %v1921, %v2264
  %2266 = vmatprep.mubr.bf16.mxu0 %v1879
  %2267 = vmatmul.mubr.bf16.gmra.mxu0 %v1878
  %v2268 = vpop.f32.mrf.mxu0
  %v2269 = vadd.f32 %v1917, %v2268
  %v2270 = vpop.f32.mrf.mxu0
  %v2271 = vadd.f32 %v1921, %v2270
  %v2272 = vpop.f32.mrf.mxu0
  %v2273 = vadd.f32 %v1917, %v2272
  %v2274 = vpop.f32.mrf.mxu0
  %v2275 = vadd.f32 %v1921, %v2274
  %2276 = vdwg.mxu0
  %v2277 = vmax.f32 %v2119, 0.0
  %v2278 = vmax.f32 %v2121, 0.0
  %v2279 = vmax.f32 %v2123, 0.0
  %v2280 = vmax.f32 %v2125, 0.0
  %v2281 = vmax.f32 %v2129, 0.0
  %v2282 = vmax.f32 %v2131, 0.0
  %v2283 = vmax.f32 %v2133, 0.0
  %v2284 = vmax.f32 %v2135, 0.0
  %v2285 = vmax.f32 %v2139, 0.0
  %v2286 = vmax.f32 %v2141, 0.0
  %v2287 = vmax.f32 %v2143, 0.0
  %v2288 = vmax.f32 %v2145, 0.0
  %v2289 = vmax.f32 %v2149, 0.0
  %v2290 = vmax.f32 %v2151, 0.0
  %v2291 = vmax.f32 %v2153, 0.0
  %v2292 = vmax.f32 %v2155, 0.0
  %v2293 = vmax.f32 %v2159, 0.0
  %v2294 = vmax.f32 %v2161, 0.0
  %v2295 = vmax.f32 %v2163, 0.0
  %v2296 = vmax.f32 %v2165, 0.0
  %v2297 = vmax.f32 %v2169, 0.0
  %v2298 = vmax.f32 %v2171, 0.0
  %v2299 = vmax.f32 %v2173, 0.0
  %v2300 = vmax.f32 %v2175, 0.0
  %v2301 = vmax.f32 %v2179, 0.0
  %v2302 = vmax.f32 %v2181, 0.0
  %v2303 = vmax.f32 %v2183, 0.0
  %v2304 = vmax.f32 %v2185, 0.0
  %v2305 = vmax.f32 %v2189, 0.0
  %v2306 = vmax.f32 %v2191, 0.0
  %v2307 = vmax.f32 %v2193, 0.0
  %v2308 = vmax.f32 %v2195, 0.0
  %v2309 = vmax.f32 %v2199, 0.0
  %v2310 = vmax.f32 %v2201, 0.0
  %v2311 = vmax.f32 %v2203, 0.0
  %v2312 = vmax.f32 %v2205, 0.0
  %v2313 = vmax.f32 %v2209, 0.0
  %v2314 = vmax.f32 %v2211, 0.0
  %v2315 = vmax.f32 %v2213, 0.0
  %v2316 = vmax.f32 %v2215, 0.0
  %v2317 = vmax.f32 %v2219, 0.0
  %v2318 = vmax.f32 %v2221, 0.0
  %v2319 = vmax.f32 %v2223, 0.0
  %v2320 = vmax.f32 %v2225, 0.0
  %v2321 = vmax.f32 %v2229, 0.0
  %v2322 = vmax.f32 %v2231, 0.0
  %v2323 = vmax.f32 %v2233, 0.0
  %v2324 = vmax.f32 %v2235, 0.0
  %v2325 = vmax.f32 %v2239, 0.0
  %v2326 = vmax.f32 %v2241, 0.0
  %v2327 = vmax.f32 %v2243, 0.0
  %v2328 = vmax.f32 %v2245, 0.0
  %v2329 = vmax.f32 %v2249, 0.0
  %v2330 = vmax.f32 %v2251, 0.0
  %v2331 = vmax.f32 %v2253, 0.0
  %v2332 = vmax.f32 %v2255, 0.0
  %v2333 = vmax.f32 %v2259, 0.0
  %v2334 = vmax.f32 %v2261, 0.0
  %v2335 = vmax.f32 %v2263, 0.0
  %v2336 = vmax.f32 %v2265, 0.0
  %v2337 = vmax.f32 %v2269, 0.0
  %v2338 = vmax.f32 %v2271, 0.0
  %v2339 = vmax.f32 %v2273, 0.0
  %v2340 = vmax.f32 %v2275, 0.0
  %v2341 = vpack.c.bf16 %v2279, %v2277
  %v2342 = vpack.c.bf16 %v2280, %v2278
  %v2343 = vpack.c.bf16 %v2283, %v2281
  %v2344 = vpack.c.bf16 %v2284, %v2282
  %v2345 = vpack.c.bf16 %v2287, %v2285
  %v2346 = vpack.c.bf16 %v2288, %v2286
  %v2347 = vpack.c.bf16 %v2291, %v2289
  %v2348 = vpack.c.bf16 %v2292, %v2290
  %v2349 = vpack.c.bf16 %v2295, %v2293
  %v2350 = vpack.c.bf16 %v2296, %v2294
  %v2351 = vpack.c.bf16 %v2299, %v2297
  %v2352 = vpack.c.bf16 %v2300, %v2298
  %v2353 = vpack.c.bf16 %v2303, %v2301
  %v2354 = vpack.c.bf16 %v2304, %v2302
  %v2355 = vpack.c.bf16 %v2307, %v2305
  %v2356 = vpack.c.bf16 %v2308, %v2306
  %v2357 = vpack.c.bf16 %v2311, %v2309
  %v2358 = vpack.c.bf16 %v2312, %v2310
  %v2359 = vpack.c.bf16 %v2315, %v2313
  %v2360 = vpack.c.bf16 %v2316, %v2314
  %v2361 = vpack.c.bf16 %v2319, %v2317
  %v2362 = vpack.c.bf16 %v2320, %v2318
  %v2363 = vpack.c.bf16 %v2323, %v2321
  %v2364 = vpack.c.bf16 %v2324, %v2322
  %v2365 = vpack.c.bf16 %v2327, %v2325
  %v2366 = vpack.c.bf16 %v2328, %v2326
  %v2367 = vpack.c.bf16 %v2331, %v2329
  %v2368 = vpack.c.bf16 %v2332, %v2330
  %v2369 = vpack.c.bf16 %v2335, %v2333
  %v2370 = vpack.c.bf16 %v2336, %v2334
  %v2371 = vpack.c.bf16 %v2339, %v2337
  %v2372 = vpack.c.bf16 %v2340, %v2338
  %v2373 = vld [vmem:[%s5] sm:$0xf]
  %v2374 = vld [vmem:[%s5 + $0x4] sm:$0xf]
  %v2375 = vld [vmem:[%s5 + $0x8] sm:$0xf]
  %v2376 = vld [vmem:[%s5 + $0xc] sm:$0xf]
  %v2377 = vld [vmem:[%s5 + $0x10] sm:$0xf]
  %v2378 = vld [vmem:[%s5 + $0x14] sm:$0xf]
  %v2379 = vld [vmem:[%s5 + $0x18] sm:$0xf]
  %v2380 = vld [vmem:[%s5 + $0x1c] sm:$0xf]
  %v2381 = vld [vmem:[%s5 + $0x20] sm:$0xf]
  %v2382 = vld [vmem:[%s5 + $0x24] sm:$0xf]
  %v2383 = vld [vmem:[%s5 + $0x28] sm:$0xf]
  %v2384 = vld [vmem:[%s5 + $0x2c] sm:$0xf]
  %v2385 = vld [vmem:[%s5 + $0x30] sm:$0xf]
  %v2386 = vld [vmem:[%s5 + $0x34] sm:$0xf]
  %v2387 = vld [vmem:[%s5 + $0x38] sm:$0xf]
  %v2388 = vld [vmem:[%s5 + $0x3c] sm:$0xf]
  %v2389 = vld [vmem:[%s5 + $0x40] sm:$0xf]
  %v2390 = vld [vmem:[%s5 + $0x44] sm:$0xf]
  %v2391 = vld [vmem:[%s5 + $0x48] sm:$0xf]
  %v2392 = vld [vmem:[%s5 + $0x4c] sm:$0xf]
  %v2393 = vld [vmem:[%s5 + $0x50] sm:$0xf]
  %v2394 = vld [vmem:[%s5 + $0x54] sm:$0xf]
  %v2395 = vld [vmem:[%s5 + $0x58] sm:$0xf]
  %v2396 = vld [vmem:[%s5 + $0x5c] sm:$0xf]
  %v2397 = vld [vmem:[%s5 + $0x60] sm:$0xf]
  %v2398 = vld [vmem:[%s5 + $0x64] sm:$0xf]
  %v2399 = vld [vmem:[%s5 + $0x68] sm:$0xf]
  %v2400 = vld [vmem:[%s5 + $0x6c] sm:$0xf]
  %v2401 = vld [vmem:[%s5 + $0x70] sm:$0xf]
  %v2402 = vld [vmem:[%s5 + $0x74] sm:$0xf]
  %v2403 = vld [vmem:[%s5 + $0x78] sm:$0xf]
  %v2404 = vld [vmem:[%s5 + $0x7c] sm:$0xf]
  %v2405 = vld [vmem:[%s6] sm:$0x1]
  %v2407 = vlaneseq
  %v2408 = vshrl.u32 %v2407, 7
  %v2409 = vsub.s32 0, %v2408
  %v2410 = vrot.slane %v2405, %v2409
  %v2444 = vunpack.c.l.b16 %v2373
  %v2445 = vunpack.c.l.b16 %v2374
  %v2446 = vunpack.c.l.b16 %v2375
  %v2447 = vunpack.c.l.b16 %v2376
  %v2448 = vunpack.c.l.b16 %v2377
  %v2449 = vunpack.c.l.b16 %v2378
  %v2450 = vunpack.c.l.b16 %v2379
  %v2451 = vunpack.c.l.b16 %v2380
  %v2452 = vunpack.c.l.b16 %v2381
  %v2453 = vunpack.c.l.b16 %v2382
  %v2454 = vunpack.c.l.b16 %v2383
  %v2455 = vunpack.c.l.b16 %v2384
  %v2456 = vunpack.c.l.b16 %v2385
  %v2457 = vunpack.c.l.b16 %v2386
  %v2458 = vunpack.c.l.b16 %v2387
  %v2459 = vunpack.c.l.b16 %v2388
  %v2460 = vunpack.c.l.b16 %v2389
  %v2461 = vunpack.c.l.b16 %v2390
  %v2462 = vunpack.c.l.b16 %v2391
  %v2463 = vunpack.c.l.b16 %v2392
  %v2464 = vunpack.c.l.b16 %v2393
  %v2465 = vunpack.c.l.b16 %v2394
  %v2466 = vunpack.c.l.b16 %v2395
  %v2467 = vunpack.c.l.b16 %v2396
  %v2468 = vunpack.c.l.b16 %v2397
  %v2469 = vunpack.c.l.b16 %v2398
  %v2470 = vunpack.c.l.b16 %v2399
  %v2471 = vunpack.c.l.b16 %v2400
  %v2472 = vunpack.c.l.b16 %v2401
  %v2473 = vunpack.c.l.b16 %v2402
  %v2474 = vunpack.c.l.b16 %v2403
  %v2475 = vunpack.c.l.b16 %v2404
  %v2476 = vpack.c.b16 %v2445, %v2444
  %v2477 = vpack.c.b16 %v2447, %v2446
  %v2478 = vpack.c.b16 %v2449, %v2448
  %v2479 = vpack.c.b16 %v2451, %v2450
  %v2480 = vpack.c.b16 %v2453, %v2452
  %v2481 = vpack.c.b16 %v2455, %v2454
  %v2482 = vpack.c.b16 %v2457, %v2456
  %v2483 = vpack.c.b16 %v2459, %v2458
  %v2484 = vpack.c.b16 %v2461, %v2460
  %v2485 = vpack.c.b16 %v2463, %v2462
  %v2486 = vpack.c.b16 %v2465, %v2464
  %v2487 = vpack.c.b16 %v2467, %v2466
  %v2488 = vpack.c.b16 %v2469, %v2468
  %v2489 = vpack.c.b16 %v2471, %v2470
  %v2490 = vpack.c.b16 %v2473, %v2472
  %v2491 = vpack.c.b16 %v2475, %v2474
  %2508 = vmatprep.subr.bf16.mxu0 0
  %2509 = vmatpush1.bf16.msra.mxu0 %v2483
  %2510 = vmatprep.subr.bf16.mxu0 0
  %2511 = vmatpush1.bf16.msra.mxu0 %v2482
  %2512 = vmatprep.subr.bf16.mxu0 0
  %2513 = vmatpush1.bf16.msra.mxu0 %v2481
  %2514 = vmatprep.subr.bf16.mxu0 0
  %2515 = vmatpush1.bf16.msra.mxu0 %v2480
  %2516 = vmatprep.subr.bf16.mxu0 0
  %2517 = vmatpush1.bf16.msra.mxu0 %v2479
  %2518 = vmatprep.subr.bf16.mxu0 0
  %2519 = vmatpush1.bf16.msra.mxu0 %v2478
  %2520 = vmatprep.subr.bf16.mxu0 0
  %2521 = vmatpush1.bf16.msra.mxu0 %v2477
  %2522 = vmatprep.subr.bf16.mxu0 0
  %2523 = vmatpush1.bf16.msra.mxu0 %v2476
  %2524 = vmatprep.subr.bf16.mxu0 0
  %2525 = vmatpush2.bf16.msra.mxu0 %v2491
  %2526 = vmatprep.subr.bf16.mxu0 0
  %2527 = vmatpush2.bf16.msra.mxu0 %v2490
  %2528 = vmatprep.subr.bf16.mxu0 0
  %2529 = vmatpush2.bf16.msra.mxu0 %v2489
  %2530 = vmatprep.subr.bf16.mxu0 0
  %2531 = vmatpush2.bf16.msra.mxu0 %v2488
  %2532 = vmatprep.subr.bf16.mxu0 0
  %2533 = vmatpush2.bf16.msra.mxu0 %v2487
  %2534 = vmatprep.subr.bf16.mxu0 0
  %2535 = vmatpush2.bf16.msra.mxu0 %v2486
  %2536 = vmatprep.subr.bf16.mxu0 0
  %2537 = vmatpush2.bf16.msra.mxu0 %v2485
  %2538 = vmatprep.subr.bf16.mxu0 0
  %2539 = vmatpush2.bf16.msra.mxu0 %v2484
  %2540 = vmatprep.mubr.bf16.mxu0 %v2342
  %2541 = vmatmul.mubr.bf16.gmra.mxu0 %v2341
  %v2542 = vpop.f32.mrf.mxu0
  %v2543 = vadd.f32 %v2410, %v2542
  %v2544 = vpop.f32.mrf.mxu0
  %v2545 = vpop.f32.mrf.mxu0
  %v2546 = vadd.f32 %v2410, %v2545
  %v2547 = vpop.f32.mrf.mxu0
  %2548 = vmatprep.mubr.bf16.mxu0 %v2344
  %2549 = vmatmul.mubr.bf16.gmra.mxu0 %v2343
  %v2550 = vpop.f32.mrf.mxu0
  %v2551 = vadd.f32 %v2410, %v2550
  %v2552 = vpop.f32.mrf.mxu0
  %v2553 = vpop.f32.mrf.mxu0
  %v2554 = vadd.f32 %v2410, %v2553
  %v2555 = vpop.f32.mrf.mxu0
  %2556 = vmatprep.mubr.bf16.mxu0 %v2346
  %2557 = vmatmul.mubr.bf16.gmra.mxu0 %v2345
  %v2558 = vpop.f32.mrf.mxu0
  %v2559 = vadd.f32 %v2410, %v2558
  %v2560 = vpop.f32.mrf.mxu0
  %v2561 = vpop.f32.mrf.mxu0
  %v2562 = vadd.f32 %v2410, %v2561
  %v2563 = vpop.f32.mrf.mxu0
  %2564 = vmatprep.mubr.bf16.mxu0 %v2348
  %2565 = vmatmul.mubr.bf16.gmra.mxu0 %v2347
  %v2566 = vpop.f32.mrf.mxu0
  %v2567 = vadd.f32 %v2410, %v2566
  %v2568 = vpop.f32.mrf.mxu0
  %v2569 = vpop.f32.mrf.mxu0
  %v2570 = vadd.f32 %v2410, %v2569
  %v2571 = vpop.f32.mrf.mxu0
  %2572 = vmatprep.mubr.bf16.mxu0 %v2350
  %2573 = vmatmul.mubr.bf16.gmra.mxu0 %v2349
  %v2574 = vpop.f32.mrf.mxu0
  %v2575 = vadd.f32 %v2410, %v2574
  %v2576 = vpop.f32.mrf.mxu0
  %v2577 = vpop.f32.mrf.mxu0
  %v2578 = vadd.f32 %v2410, %v2577
  %v2579 = vpop.f32.mrf.mxu0
  %2580 = vmatprep.mubr.bf16.mxu0 %v2352
  %2581 = vmatmul.mubr.bf16.gmra.mxu0 %v2351
  %v2582 = vpop.f32.mrf.mxu0
  %v2583 = vadd.f32 %v2410, %v2582
  %v2584 = vpop.f32.mrf.mxu0
  %v2585 = vpop.f32.mrf.mxu0
  %v2586 = vadd.f32 %v2410, %v2585
  %v2587 = vpop.f32.mrf.mxu0
  %2588 = vmatprep.mubr.bf16.mxu0 %v2354
  %2589 = vmatmul.mubr.bf16.gmra.mxu0 %v2353
  %v2590 = vpop.f32.mrf.mxu0
  %v2591 = vadd.f32 %v2410, %v2590
  %v2592 = vpop.f32.mrf.mxu0
  %v2593 = vpop.f32.mrf.mxu0
  %v2594 = vadd.f32 %v2410, %v2593
  %v2595 = vpop.f32.mrf.mxu0
  %2596 = vmatprep.mubr.bf16.mxu0 %v2356
  %2597 = vmatmul.mubr.bf16.gmra.mxu0 %v2355
  %v2598 = vpop.f32.mrf.mxu0
  %v2599 = vadd.f32 %v2410, %v2598
  %v2600 = vpop.f32.mrf.mxu0
  %v2601 = vpop.f32.mrf.mxu0
  %v2602 = vadd.f32 %v2410, %v2601
  %v2603 = vpop.f32.mrf.mxu0
  %2604 = vmatprep.mubr.bf16.mxu0 %v2358
  %2605 = vmatmul.mubr.bf16.gmra.mxu0 %v2357
  %v2606 = vpop.f32.mrf.mxu0
  %v2607 = vadd.f32 %v2410, %v2606
  %v2608 = vpop.f32.mrf.mxu0
  %v2609 = vpop.f32.mrf.mxu0
  %v2610 = vadd.f32 %v2410, %v2609
  %v2611 = vpop.f32.mrf.mxu0
  %2612 = vmatprep.mubr.bf16.mxu0 %v2360
  %2613 = vmatmul.mubr.bf16.gmra.mxu0 %v2359
  %v2614 = vpop.f32.mrf.mxu0
  %v2615 = vadd.f32 %v2410, %v2614
  %v2616 = vpop.f32.mrf.mxu0
  %v2617 = vpop.f32.mrf.mxu0
  %v2618 = vadd.f32 %v2410, %v2617
  %v2619 = vpop.f32.mrf.mxu0
  %2620 = vmatprep.mubr.bf16.mxu0 %v2362
  %2621 = vmatmul.mubr.bf16.gmra.mxu0 %v2361
  %v2622 = vpop.f32.mrf.mxu0
  %v2623 = vadd.f32 %v2410, %v2622
  %v2624 = vpop.f32.mrf.mxu0
  %v2625 = vpop.f32.mrf.mxu0
  %v2626 = vadd.f32 %v2410, %v2625
  %v2627 = vpop.f32.mrf.mxu0
  %2628 = vmatprep.mubr.bf16.mxu0 %v2364
  %2629 = vmatmul.mubr.bf16.gmra.mxu0 %v2363
  %v2630 = vpop.f32.mrf.mxu0
  %v2631 = vadd.f32 %v2410, %v2630
  %v2632 = vpop.f32.mrf.mxu0
  %v2633 = vpop.f32.mrf.mxu0
  %v2634 = vadd.f32 %v2410, %v2633
  %v2635 = vpop.f32.mrf.mxu0
  %2636 = vmatprep.mubr.bf16.mxu0 %v2366
  %2637 = vmatmul.mubr.bf16.gmra.mxu0 %v2365
  %v2638 = vpop.f32.mrf.mxu0
  %v2639 = vadd.f32 %v2410, %v2638
  %v2640 = vpop.f32.mrf.mxu0
  %v2641 = vpop.f32.mrf.mxu0
  %v2642 = vadd.f32 %v2410, %v2641
  %v2643 = vpop.f32.mrf.mxu0
  %2644 = vmatprep.mubr.bf16.mxu0 %v2368
  %2645 = vmatmul.mubr.bf16.gmra.mxu0 %v2367
  %v2646 = vpop.f32.mrf.mxu0
  %v2647 = vadd.f32 %v2410, %v2646
  %v2648 = vpop.f32.mrf.mxu0
  %v2649 = vpop.f32.mrf.mxu0
  %v2650 = vadd.f32 %v2410, %v2649
  %v2651 = vpop.f32.mrf.mxu0
  %2652 = vmatprep.mubr.bf16.mxu0 %v2370
  %2653 = vmatmul.mubr.bf16.gmra.mxu0 %v2369
  %v2654 = vpop.f32.mrf.mxu0
  %v2655 = vadd.f32 %v2410, %v2654
  %v2656 = vpop.f32.mrf.mxu0
  %v2657 = vpop.f32.mrf.mxu0
  %v2658 = vadd.f32 %v2410, %v2657
  %v2659 = vpop.f32.mrf.mxu0
  %2660 = vmatprep.mubr.bf16.mxu0 %v2372
  %2661 = vmatmul.mubr.bf16.gmra.mxu0 %v2371
  %v2662 = vpop.f32.mrf.mxu0
  %v2663 = vadd.f32 %v2410, %v2662
  %v2664 = vpop.f32.mrf.mxu0
  %v2665 = vpop.f32.mrf.mxu0
  %v2666 = vadd.f32 %v2410, %v2665
  %v2667 = vpop.f32.mrf.mxu0
  %2668 = vdwg.mxu0
  %v2669 = vpack.c.bf16 %v2546, %v2543
  %v2670 = vpack.c.bf16 %v2554, %v2551
  %v2671 = vpack.c.bf16 %v2562, %v2559
  %v2672 = vpack.c.bf16 %v2570, %v2567
  %v2673 = vpack.c.bf16 %v2578, %v2575
  %v2674 = vpack.c.bf16 %v2586, %v2583
  %v2675 = vpack.c.bf16 %v2594, %v2591
  %v2676 = vpack.c.bf16 %v2602, %v2599
  %v2677 = vpack.c.bf16 %v2610, %v2607
  %v2678 = vpack.c.bf16 %v2618, %v2615
  %v2679 = vpack.c.bf16 %v2626, %v2623
  %v2680 = vpack.c.bf16 %v2634, %v2631
  %v2681 = vpack.c.bf16 %v2642, %v2639
  %v2682 = vpack.c.bf16 %v2650, %v2647
  %v2683 = vpack.c.bf16 %v2658, %v2655
  %v2684 = vpack.c.bf16 %v2666, %v2663
  %v2701 = vunpack.c.l.b16 %v2669
  %v2702 = vunpack.c.h.b16 %v2669
  %v2703 = vunpack.c.l.b16 %v2670
  %v2704 = vunpack.c.h.b16 %v2670
  %v2705 = vunpack.c.l.b16 %v2671
  %v2706 = vunpack.c.h.b16 %v2671
  %v2707 = vunpack.c.l.b16 %v2672
  %v2708 = vunpack.c.h.b16 %v2672
  %v2709 = vunpack.c.l.b16 %v2673
  %v2710 = vunpack.c.h.b16 %v2673
  %v2711 = vunpack.c.l.b16 %v2674
  %v2712 = vunpack.c.h.b16 %v2674
  %v2713 = vunpack.c.l.b16 %v2675
  %v2714 = vunpack.c.h.b16 %v2675
  %v2715 = vunpack.c.l.b16 %v2676
  %v2716 = vunpack.c.h.b16 %v2676
  %v2717 = vunpack.c.l.b16 %v2677
  %v2718 = vunpack.c.h.b16 %v2677
  %v2719 = vunpack.c.l.b16 %v2678
  %v2720 = vunpack.c.h.b16 %v2678
  %v2721 = vunpack.c.l.b16 %v2679
  %v2722 = vunpack.c.h.b16 %v2679
  %v2723 = vunpack.c.l.b16 %v2680
  %v2724 = vunpack.c.h.b16 %v2680
  %v2725 = vunpack.c.l.b16 %v2681
  %v2726 = vunpack.c.h.b16 %v2681
  %v2727 = vunpack.c.l.b16 %v2682
  %v2728 = vunpack.c.h.b16 %v2682
  %v2729 = vunpack.c.l.b16 %v2683
  %v2730 = vunpack.c.h.b16 %v2683
  %v2731 = vunpack.c.l.b16 %v2684
  %v2732 = vunpack.c.h.b16 %v2684
  %v2733 = vpack.c.b16 %v2701, %v2701
  %v2734 = vpack.c.b16 %v2702, %v2702
  %v2735 = vpack.c.b16 %v2703, %v2703
  %v2736 = vpack.c.b16 %v2704, %v2704
  %v2737 = vpack.c.b16 %v2705, %v2705
  %v2738 = vpack.c.b16 %v2706, %v2706
  %v2739 = vpack.c.b16 %v2707, %v2707
  %v2740 = vpack.c.b16 %v2708, %v2708
  %v2741 = vpack.c.b16 %v2709, %v2709
  %v2742 = vpack.c.b16 %v2710, %v2710
  %v2743 = vpack.c.b16 %v2711, %v2711
  %v2744 = vpack.c.b16 %v2712, %v2712
  %v2745 = vpack.c.b16 %v2713, %v2713
  %v2746 = vpack.c.b16 %v2714, %v2714
  %v2747 = vpack.c.b16 %v2715, %v2715
  %v2748 = vpack.c.b16 %v2716, %v2716
  %v2749 = vpack.c.b16 %v2717, %v2717
  %v2750 = vpack.c.b16 %v2718, %v2718
  %v2751 = vpack.c.b16 %v2719, %v2719
  %v2752 = vpack.c.b16 %v2720, %v2720
  %v2753 = vpack.c.b16 %v2721, %v2721
  %v2754 = vpack.c.b16 %v2722, %v2722
  %v2755 = vpack.c.b16 %v2723, %v2723
  %v2756 = vpack.c.b16 %v2724, %v2724
  %v2757 = vpack.c.b16 %v2725, %v2725
  %v2758 = vpack.c.b16 %v2726, %v2726
  %v2759 = vpack.c.b16 %v2727, %v2727
  %v2760 = vpack.c.b16 %v2728, %v2728
  %v2761 = vpack.c.b16 %v2729, %v2729
  %v2762 = vpack.c.b16 %v2730, %v2730
  %v2763 = vpack.c.b16 %v2731, %v2731
  %v2764 = vpack.c.b16 %v2732, %v2732
  %2797 = vst [vmem:[%s7] sm:$0xf] %v2733
  %2798 = vst [vmem:[%s7 + $0x4] sm:$0xf] %v2734
  %2799 = vst [vmem:[%s7 + $0x8] sm:$0xf] %v2735
  %2800 = vst [vmem:[%s7 + $0xc] sm:$0xf] %v2736
  %2801 = vst [vmem:[%s7 + $0x10] sm:$0xf] %v2737
  %2802 = vst [vmem:[%s7 + $0x14] sm:$0xf] %v2738
  %2803 = vst [vmem:[%s7 + $0x18] sm:$0xf] %v2739
  %2804 = vst [vmem:[%s7 + $0x1c] sm:$0xf] %v2740
  %2805 = vst [vmem:[%s7 + $0x20] sm:$0xf] %v2741
  %2806 = vst [vmem:[%s7 + $0x24] sm:$0xf] %v2742
  %2807 = vst [vmem:[%s7 + $0x28] sm:$0xf] %v2743
  %2808 = vst [vmem:[%s7 + $0x2c] sm:$0xf] %v2744
  %2809 = vst [vmem:[%s7 + $0x30] sm:$0xf] %v2745
  %2810 = vst [vmem:[%s7 + $0x34] sm:$0xf] %v2746
  %2811 = vst [vmem:[%s7 + $0x38] sm:$0xf] %v2747
  %2812 = vst [vmem:[%s7 + $0x3c] sm:$0xf] %v2748
  %2813 = vst [vmem:[%s7 + $0x40] sm:$0xf] %v2749
  %2814 = vst [vmem:[%s7 + $0x44] sm:$0xf] %v2750
  %2815 = vst [vmem:[%s7 + $0x48] sm:$0xf] %v2751
  %2816 = vst [vmem:[%s7 + $0x4c] sm:$0xf] %v2752
  %2817 = vst [vmem:[%s7 + $0x50] sm:$0xf] %v2753
  %2818 = vst [vmem:[%s7 + $0x54] sm:$0xf] %v2754
  %2819 = vst [vmem:[%s7 + $0x58] sm:$0xf] %v2755
  %2820 = vst [vmem:[%s7 + $0x5c] sm:$0xf] %v2756
  %2821 = vst [vmem:[%s7 + $0x60] sm:$0xf] %v2757
  %2822 = vst [vmem:[%s7 + $0x64] sm:$0xf] %v2758
  %2823 = vst [vmem:[%s7 + $0x68] sm:$0xf] %v2759
  %2824 = vst [vmem:[%s7 + $0x6c] sm:$0xf] %v2760
  %2825 = vst [vmem:[%s7 + $0x70] sm:$0xf] %v2761
  %2826 = vst [vmem:[%s7 + $0x74] sm:$0xf] %v2762
  %2827 = vst [vmem:[%s7 + $0x78] sm:$0xf] %v2763
  %2828 = vst [vmem:[%s7 + $0x7c] sm:$0xf] %v2764
  // Predicated region
  $region30: #{mlp_forward.1} parent=0 // pred_check
    _
  $region31: #{mlp_forward.1} parent=0 // pred_check_branch
    %2830 = sbr.rel (0) target = $region33
  $region32: #{mlp_forward.1} parent=0 // pred_region
    _
  $region33: #{mlp_forward.1} parent=0 // pred_fallthru
    _
  // Predicated region
  $region34: #{mlp_forward.1} parent=0 // pred_check
    _
  $region35: #{mlp_forward.1} parent=0 // pred_check_branch
    %2832 = sbr.rel (0) target = $region37
  $region36: #{mlp_forward.1} parent=0 // pred_region
    _
  $region37: #{mlp_forward.1} parent=0 // pred_fallthru
    _

</llo_original>
